<compile_context>
chip_gen: v7x
topology: tpu7x:2x2x1
jax: 0.10.0
libtpu: 0.0.40
codegen_flags: <defaults>
</compile_context>

<pallas_src>
import functools

import jax
import jax.numpy as jnp
from jax.experimental import pallas as pl
from jax.experimental.pallas import tpu as pltpu


def _attention_kernel(x_ref, wqkv_ref, wproj_ref, b_ref, o_ref, hcat_ref, *, num_heads):
    """One grid step == one batch element. All heads are handled in-kernel."""
    _, N, C = x_ref.shape
    D = C // num_heads

    x = x_ref[0]                                                        # (N, C)  bf16

    # Fused qkv projection: single lane-dense (N, C) x (C, 3C) MXU matmul, f32 acc.
    # The softmax scale is already folded into the q columns of wqkv.
    qkv = jnp.dot(x, wqkv_ref[...], preferred_element_type=jnp.float32)  # (N, 3C) f32

    # Per-head attention (static unroll: activations/weights stay resident in VMEM,
    # no per-head DMA and no per-head grid-step overhead).
    for h in range(num_heads):
        q = qkv[:, 0 * C + h * D:0 * C + (h + 1) * D].astype(jnp.bfloat16)   # (N, D)
        k = qkv[:, 1 * C + h * D:1 * C + (h + 1) * D].astype(jnp.bfloat16)   # (N, D)
        v = qkv[:, 2 * C + h * D:2 * C + (h + 1) * D].astype(jnp.bfloat16)   # (N, D)

        # Scaled dot-product attention with a numerically-stable softmax in f32.
        s = jnp.dot(q, k.T, preferred_element_type=jnp.float32)             # (N, N)
        s = s - jnp.max(s, axis=-1, keepdims=True)
        p = jnp.exp(s)
        p = p * pl.reciprocal(jnp.sum(p, axis=-1, keepdims=True), approx=True)

        head = jnp.dot(p.astype(jnp.bfloat16), v,
                       preferred_element_type=jnp.float32)                  # (N, D) f32
        # Assemble the head-concat layout in VMEM scratch (== torch .reshape(B, N, C)).
        hcat_ref[:, h * D:(h + 1) * D] = head

    # Output projection: single lane-dense (N, C) x (C, C) matmul + bias.
    # The output block is written exactly once per batch element (no RMW).
    heads = hcat_ref[...].astype(jnp.bfloat16)                               # (N, C)
    out = jnp.dot(heads, wproj_ref[...], preferred_element_type=jnp.float32)  # (N, C)
    o_ref[0] = out + b_ref[...]                                              # bias (1, C) broadcasts

    # TODO(synk): the `mask` argument of forward() (default None) and the dropout layers
    # (p=0.0 -> identity in eval) are not implemented.
    # TODO(synk): for large N, add a query-tile grid axis and flash-style online softmax
    # over KV tiles so live VMEM stays O(tq*tk + tq*C) (required on v7x's 64 MiB VMEM).


def attention_pallas(x, w_qkv, w_proj, b_proj, num_heads, qk_scale=None):
    """x: (B, N, C) f32; w_qkv: (3C, C) torch Linear layout; w_proj: (C, C); b_proj: (C,)."""
    B, N, C = x.shape
    H = num_heads
    assert C % H == 0
    D = C // H
    scale = qk_scale if qk_scale is not None else D ** -0.5

    # torch Linear: y = x @ W.T.  Fused qkv weight, columns laid out [q | k | v];
    # fold the softmax scale into the q columns (one-time parameter transform).
    w_qkv_t = jnp.asarray(w_qkv, jnp.float32).T                      # (C, 3C)
    w_qkv_t = w_qkv_t.at[:, :C].multiply(scale)
    wqkv_bf = w_qkv_t.astype(jnp.bfloat16)
    wproj_bf = jnp.asarray(w_proj, jnp.float32).T.astype(jnp.bfloat16)  # (C, C)
    bias = jnp.asarray(b_proj, jnp.float32).reshape(1, C)
    x_bf = x.astype(jnp.bfloat16)

    kernel = functools.partial(_attention_kernel, num_heads=H)

    return pl.pallas_call(
        kernel,
        out_shape=jax.ShapeDtypeStruct((B, N, C), jnp.float32),
        grid_spec=pltpu.PrefetchScalarGridSpec(
            num_scalar_prefetch=0,
            grid=(B,),                                               # heads folded in-kernel
            in_specs=[
                pl.BlockSpec((1, N, C), lambda b: (b, 0, 0)),        # x (bf16)
                pl.BlockSpec((C, 3 * C), lambda b: (0, 0)),          # fused qkv weight (resident)
                pl.BlockSpec((C, C), lambda b: (0, 0)),              # proj weight (resident)
                pl.BlockSpec((1, C), lambda b: (0, 0)),              # proj bias
            ],
            out_specs=pl.BlockSpec((1, N, C), lambda b: (b, 0, 0)),
            scratch_shapes=[pltpu.VMEM((N, C), jnp.float32)],        # head-concat buffer
        ),
        compiler_params=pltpu.CompilerParams(
            dimension_semantics=("parallel",),                       # megacore shards over batch
        ),
    )(x_bf, wqkv_bf, wproj_bf, bias)


def attention_reference(x, w_qkv, w_proj, b_proj, num_heads):
    """Pure-JAX f32 reference mirroring the PyTorch forward exactly."""
    B, N, C = x.shape
    H = num_heads
    D = C // H
    scale = D ** -0.5
    qkv = jnp.einsum("bnc,oc->bno", x, w_qkv)                        # (B, N, 3C), no bias
    qkv = qkv.reshape(B, N, 3, H, D).transpose(2, 0, 3, 1, 4)        # (3, B, H, N, D)
    q, k, v = qkv[0], qkv[1], qkv[2]
    attn = jnp.einsum("bhnd,bhmd->bhnm", q, k) * scale
    attn = jax.nn.softmax(attn, axis=-1)
    out = jnp.einsum("bhnm,bhmd->bhnd", attn, v)                     # (B, H, N, D)
    out = out.transpose(0, 2, 1, 3).reshape(B, N, C)
    out = jnp.einsum("bnc,oc->bno", out, w_proj) + b_proj
    return out


if __name__ == "__main__":
    B, N, C, H = 2, 8, 32, 8   # head_dim = 4

    key = jax.random.PRNGKey(0)
    kx, kq, kp, kb = jax.random.split(key, 4)

    x = jax.random.normal(kx, (B, N, C), dtype=jnp.float32)
    # Deterministic parameter init (qkv_bias=False -> no qkv bias; proj has bias).
    w_qkv = jax.random.normal(kq, (3 * C, C), dtype=jnp.float32) * 0.05
    w_proj = jax.random.normal(kp, (C, C), dtype=jnp.float32) * 0.05
    b_proj = jax.random.normal(kb, (C,), dtype=jnp.float32) * 0.05

    out = attention_pallas(x, w_qkv, w_proj, b_proj, H)
    out = jax.block_until_ready(out)

    ref = attention_reference(x, w_qkv, w_proj, b_proj, H)
    assert out.shape == (B, N, C)
    # bf16 matmul inputs (f32 accumulation) -> compare against the f32 reference with a
    # tolerance appropriate for bf16 rounding of the operands.
    assert jnp.allclose(out, ref, atol=2e-2, rtol=2e-2), "mismatch vs reference"

    print("KERNEL_OK")
</pallas_src>

<mosaic_0001>
module attributes {stable_mosaic.version = 11 : i64} {
  func.func @_attention_kernel(%arg0: i32, %arg1: memref<1x8x32xbf16, #tpu.memory_space<vmem>>, %arg2: memref<32x96xbf16, #tpu.memory_space<vmem>>, %arg3: memref<32x32xbf16, #tpu.memory_space<vmem>>, %arg4: memref<1x32xf32, #tpu.memory_space<vmem>>, %arg5: memref<1x8x32xf32, #tpu.memory_space<vmem>>, %arg6: memref<8x32xf32, #tpu.memory_space<vmem>>) attributes {dimension_semantics = [#tpu.dimension_semantics<parallel>], iteration_bounds = array<i64: 2>, scalar_prefetch = 0 : i64, scratch_operands = 1 : i64, tpu.core_type = #tpu.core_type<tc>, window_params = [{transform_indices = @transform_0, window_bounds = array<i64: 1, 8, 32>}, {pipeline_mode = #tpu.pipeline_mode<synchronous>, transform_indices = @transform_1, window_bounds = array<i64: 32, 96>}, {pipeline_mode = #tpu.pipeline_mode<synchronous>, transform_indices = @transform_2, window_bounds = array<i64: 32, 32>}, {pipeline_mode = #tpu.pipeline_mode<synchronous>, transform_indices = @transform_3, window_bounds = array<i64: 1, 32>}, {transform_indices = @transform_4, window_bounds = array<i64: 1, 8, 32>}]} {
    %c0 = arith.constant 0 : index
    %c0_0 = arith.constant 0 : index
    %c0_1 = arith.constant 0 : index
    %0 = vector.load %arg1[%c0, %c0_0, %c0_1] : memref<1x8x32xbf16, #tpu.memory_space<vmem>>, vector<1x8x32xbf16>
    %1 = vector.shape_cast %0 : vector<1x8x32xbf16> to vector<8x32xbf16>
    %c0_2 = arith.constant 0 : index
    %c0_3 = arith.constant 0 : index
    %2 = vector.load %arg2[%c0_2, %c0_3] : memref<32x96xbf16, #tpu.memory_space<vmem>>, vector<32x96xbf16>
    %cst = arith.constant dense<0.000000e+00> : vector<8x96xf32>
    %3 = tpu.matmul %1, %2, %cst {dimension_numbers = #tpu.dot_dimension_numbers<[1], [0], [0], [1], [0, 0, 1, 1], [], []>} : vector<8x32xbf16>, vector<32x96xbf16>, vector<8x96xf32> -> vector<8x96xf32>
    %4 = vector.extract_strided_slice %3 {offsets = [0, 0], sizes = [8, 4], strides = [1, 1]} : vector<8x96xf32> to vector<8x4xf32>
    %5 = arith.truncf %4 : vector<8x4xf32> to vector<8x4xbf16>
    %6 = vector.extract_strided_slice %3 {offsets = [0, 32], sizes = [8, 4], strides = [1, 1]} : vector<8x96xf32> to vector<8x4xf32>
    %7 = arith.truncf %6 : vector<8x4xf32> to vector<8x4xbf16>
    %8 = vector.extract_strided_slice %3 {offsets = [0, 64], sizes = [8, 4], strides = [1, 1]} : vector<8x96xf32> to vector<8x4xf32>
    %9 = arith.truncf %8 : vector<8x4xf32> to vector<8x4xbf16>
    %10 = tpu.transpose %7, [1, 0] : vector<8x4xbf16> -> vector<4x8xbf16>
    %cst_4 = arith.constant dense<0.000000e+00> : vector<8x8xf32>
    %11 = tpu.matmul %5, %10, %cst_4 {dimension_numbers = #tpu.dot_dimension_numbers<[1], [0], [0], [1], [0, 0, 1, 1], [], []>} : vector<8x4xbf16>, vector<4x8xbf16>, vector<8x8xf32> -> vector<8x8xf32>
    %cst_5 = arith.constant dense<0xFF800000> : vector<8xf32>
    %12 = vector.multi_reduction <maximumf>, %11, %cst_5 [1] : vector<8x8xf32> to vector<8xf32>
    %13 = vector.shape_cast %12 : vector<8xf32> to vector<8x1xf32>
    %14 = vector.broadcast %13 : vector<8x1xf32> to vector<8x8xf32>
    %15 = arith.subf %11, %14 : vector<8x8xf32>
    %16 = math.exp %15 : vector<8x8xf32>
    %cst_6 = arith.constant dense<0.000000e+00> : vector<8xf32>
    %17 = vector.multi_reduction <add>, %16, %cst_6 [1] : vector<8x8xf32> to vector<8xf32>
    %18 = vector.shape_cast %17 : vector<8xf32> to vector<8x1xf32>
    %19 = tpu.reciprocal %18 {approx = true} : vector<8x1xf32> -> vector<8x1xf32>
    %20 = vector.broadcast %19 : vector<8x1xf32> to vector<8x8xf32>
    %21 = arith.mulf %16, %20 : vector<8x8xf32>
    %22 = arith.truncf %21 : vector<8x8xf32> to vector<8x8xbf16>
    %cst_7 = arith.constant dense<0.000000e+00> : vector<8x4xf32>
    %23 = tpu.matmul %22, %9, %cst_7 {dimension_numbers = #tpu.dot_dimension_numbers<[1], [0], [0], [1], [0, 0, 1, 1], [], []>} : vector<8x8xbf16>, vector<8x4xbf16>, vector<8x4xf32> -> vector<8x4xf32>
    %c0_8 = arith.constant 0 : index
    %c0_9 = arith.constant 0 : index
    %24 = vector.load %arg6[%c0_8, %c0_9] : memref<8x32xf32, #tpu.memory_space<vmem>>, vector<8x4xf32>
    tpu.vector_store %arg6[%c0_8, %c0_9], %23 {strides = array<i32>} : memref<8x32xf32, #tpu.memory_space<vmem>>, vector<8x4xf32>,
    %25 = vector.extract_strided_slice %3 {offsets = [0, 4], sizes = [8, 4], strides = [1, 1]} : vector<8x96xf32> to vector<8x4xf32>
    %26 = arith.truncf %25 : vector<8x4xf32> to vector<8x4xbf16>
    %27 = vector.extract_strided_slice %3 {offsets = [0, 36], sizes = [8, 4], strides = [1, 1]} : vector<8x96xf32> to vector<8x4xf32>
    %28 = arith.truncf %27 : vector<8x4xf32> to vector<8x4xbf16>
    %29 = vector.extract_strided_slice %3 {offsets = [0, 68], sizes = [8, 4], strides = [1, 1]} : vector<8x96xf32> to vector<8x4xf32>
    %30 = arith.truncf %29 : vector<8x4xf32> to vector<8x4xbf16>
    %31 = tpu.transpose %28, [1, 0] : vector<8x4xbf16> -> vector<4x8xbf16>
    %cst_10 = arith.constant dense<0.000000e+00> : vector<8x8xf32>
    %32 = tpu.matmul %26, %31, %cst_10 {dimension_numbers = #tpu.dot_dimension_numbers<[1], [0], [0], [1], [0, 0, 1, 1], [], []>} : vector<8x4xbf16>, vector<4x8xbf16>, vector<8x8xf32> -> vector<8x8xf32>
    %cst_11 = arith.constant dense<0xFF800000> : vector<8xf32>
    %33 = vector.multi_reduction <maximumf>, %32, %cst_11 [1] : vector<8x8xf32> to vector<8xf32>
    %34 = vector.shape_cast %33 : vector<8xf32> to vector<8x1xf32>
    %35 = vector.broadcast %34 : vector<8x1xf32> to vector<8x8xf32>
    %36 = arith.subf %32, %35 : vector<8x8xf32>
    %37 = math.exp %36 : vector<8x8xf32>
    %cst_12 = arith.constant dense<0.000000e+00> : vector<8xf32>
    %38 = vector.multi_reduction <add>, %37, %cst_12 [1] : vector<8x8xf32> to vector<8xf32>
    %39 = vector.shape_cast %38 : vector<8xf32> to vector<8x1xf32>
    %40 = tpu.reciprocal %39 {approx = true} : vector<8x1xf32> -> vector<8x1xf32>
    %41 = vector.broadcast %40 : vector<8x1xf32> to vector<8x8xf32>
    %42 = arith.mulf %37, %41 : vector<8x8xf32>
    %43 = arith.truncf %42 : vector<8x8xf32> to vector<8x8xbf16>
    %cst_13 = arith.constant dense<0.000000e+00> : vector<8x4xf32>
    %44 = tpu.matmul %43, %30, %cst_13 {dimension_numbers = #tpu.dot_dimension_numbers<[1], [0], [0], [1], [0, 0, 1, 1], [], []>} : vector<8x8xbf16>, vector<8x4xbf16>, vector<8x4xf32> -> vector<8x4xf32>
    %c0_14 = arith.constant 0 : index
    %c4 = arith.constant 4 : index
    %45 = vector.load %arg6[%c0_14, %c4] : memref<8x32xf32, #tpu.memory_space<vmem>>, vector<8x4xf32>
    tpu.vector_store %arg6[%c0_14, %c4], %44 {strides = array<i32>} : memref<8x32xf32, #tpu.memory_space<vmem>>, vector<8x4xf32>,
    %46 = vector.extract_strided_slice %3 {offsets = [0, 8], sizes = [8, 4], strides = [1, 1]} : vector<8x96xf32> to vector<8x4xf32>
    %47 = arith.truncf %46 : vector<8x4xf32> to vector<8x4xbf16>
    %48 = vector.extract_strided_slice %3 {offsets = [0, 40], sizes = [8, 4], strides = [1, 1]} : vector<8x96xf32> to vector<8x4xf32>
    %49 = arith.truncf %48 : vector<8x4xf32> to vector<8x4xbf16>
    %50 = vector.extract_strided_slice %3 {offsets = [0, 72], sizes = [8, 4], strides = [1, 1]} : vector<8x96xf32> to vector<8x4xf32>
    %51 = arith.truncf %50 : vector<8x4xf32> to vector<8x4xbf16>
    %52 = tpu.transpose %49, [1, 0] : vector<8x4xbf16> -> vector<4x8xbf16>
    %cst_15 = arith.constant dense<0.000000e+00> : vector<8x8xf32>
    %53 = tpu.matmul %47, %52, %cst_15 {dimension_numbers = #tpu.dot_dimension_numbers<[1], [0], [0], [1], [0, 0, 1, 1], [], []>} : vector<8x4xbf16>, vector<4x8xbf16>, vector<8x8xf32> -> vector<8x8xf32>
    %cst_16 = arith.constant dense<0xFF800000> : vector<8xf32>
    %54 = vector.multi_reduction <maximumf>, %53, %cst_16 [1] : vector<8x8xf32> to vector<8xf32>
    %55 = vector.shape_cast %54 : vector<8xf32> to vector<8x1xf32>
    %56 = vector.broadcast %55 : vector<8x1xf32> to vector<8x8xf32>
    %57 = arith.subf %53, %56 : vector<8x8xf32>
    %58 = math.exp %57 : vector<8x8xf32>
    %cst_17 = arith.constant dense<0.000000e+00> : vector<8xf32>
    %59 = vector.multi_reduction <add>, %58, %cst_17 [1] : vector<8x8xf32> to vector<8xf32>
    %60 = vector.shape_cast %59 : vector<8xf32> to vector<8x1xf32>
    %61 = tpu.reciprocal %60 {approx = true} : vector<8x1xf32> -> vector<8x1xf32>
    %62 = vector.broadcast %61 : vector<8x1xf32> to vector<8x8xf32>
    %63 = arith.mulf %58, %62 : vector<8x8xf32>
    %64 = arith.truncf %63 : vector<8x8xf32> to vector<8x8xbf16>
    %cst_18 = arith.constant dense<0.000000e+00> : vector<8x4xf32>
    %65 = tpu.matmul %64, %51, %cst_18 {dimension_numbers = #tpu.dot_dimension_numbers<[1], [0], [0], [1], [0, 0, 1, 1], [], []>} : vector<8x8xbf16>, vector<8x4xbf16>, vector<8x4xf32> -> vector<8x4xf32>
    %c0_19 = arith.constant 0 : index
    %c8 = arith.constant 8 : index
    %66 = vector.load %arg6[%c0_19, %c8] : memref<8x32xf32, #tpu.memory_space<vmem>>, vector<8x4xf32>
    tpu.vector_store %arg6[%c0_19, %c8], %65 {strides = array<i32>} : memref<8x32xf32, #tpu.memory_space<vmem>>, vector<8x4xf32>,
    %67 = vector.extract_strided_slice %3 {offsets = [0, 12], sizes = [8, 4], strides = [1, 1]} : vector<8x96xf32> to vector<8x4xf32>
    %68 = arith.truncf %67 : vector<8x4xf32> to vector<8x4xbf16>
    %69 = vector.extract_strided_slice %3 {offsets = [0, 44], sizes = [8, 4], strides = [1, 1]} : vector<8x96xf32> to vector<8x4xf32>
    %70 = arith.truncf %69 : vector<8x4xf32> to vector<8x4xbf16>
    %71 = vector.extract_strided_slice %3 {offsets = [0, 76], sizes = [8, 4], strides = [1, 1]} : vector<8x96xf32> to vector<8x4xf32>
    %72 = arith.truncf %71 : vector<8x4xf32> to vector<8x4xbf16>
    %73 = tpu.transpose %70, [1, 0] : vector<8x4xbf16> -> vector<4x8xbf16>
    %cst_20 = arith.constant dense<0.000000e+00> : vector<8x8xf32>
    %74 = tpu.matmul %68, %73, %cst_20 {dimension_numbers = #tpu.dot_dimension_numbers<[1], [0], [0], [1], [0, 0, 1, 1], [], []>} : vector<8x4xbf16>, vector<4x8xbf16>, vector<8x8xf32> -> vector<8x8xf32>
    %cst_21 = arith.constant dense<0xFF800000> : vector<8xf32>
    %75 = vector.multi_reduction <maximumf>, %74, %cst_21 [1] : vector<8x8xf32> to vector<8xf32>
    %76 = vector.shape_cast %75 : vector<8xf32> to vector<8x1xf32>
    %77 = vector.broadcast %76 : vector<8x1xf32> to vector<8x8xf32>
    %78 = arith.subf %74, %77 : vector<8x8xf32>
    %79 = math.exp %78 : vector<8x8xf32>
    %cst_22 = arith.constant dense<0.000000e+00> : vector<8xf32>
    %80 = vector.multi_reduction <add>, %79, %cst_22 [1] : vector<8x8xf32> to vector<8xf32>
    %81 = vector.shape_cast %80 : vector<8xf32> to vector<8x1xf32>
    %82 = tpu.reciprocal %81 {approx = true} : vector<8x1xf32> -> vector<8x1xf32>
    %83 = vector.broadcast %82 : vector<8x1xf32> to vector<8x8xf32>
    %84 = arith.mulf %79, %83 : vector<8x8xf32>
    %85 = arith.truncf %84 : vector<8x8xf32> to vector<8x8xbf16>
    %cst_23 = arith.constant dense<0.000000e+00> : vector<8x4xf32>
    %86 = tpu.matmul %85, %72, %cst_23 {dimension_numbers = #tpu.dot_dimension_numbers<[1], [0], [0], [1], [0, 0, 1, 1], [], []>} : vector<8x8xbf16>, vector<8x4xbf16>, vector<8x4xf32> -> vector<8x4xf32>
    %c0_24 = arith.constant 0 : index
    %c12 = arith.constant 12 : index
    %87 = vector.load %arg6[%c0_24, %c12] : memref<8x32xf32, #tpu.memory_space<vmem>>, vector<8x4xf32>
    tpu.vector_store %arg6[%c0_24, %c12], %86 {strides = array<i32>} : memref<8x32xf32, #tpu.memory_space<vmem>>, vector<8x4xf32>,
    %88 = vector.extract_strided_slice %3 {offsets = [0, 16], sizes = [8, 4], strides = [1, 1]} : vector<8x96xf32> to vector<8x4xf32>
    %89 = arith.truncf %88 : vector<8x4xf32> to vector<8x4xbf16>
    %90 = vector.extract_strided_slice %3 {offsets = [0, 48], sizes = [8, 4], strides = [1, 1]} : vector<8x96xf32> to vector<8x4xf32>
    %91 = arith.truncf %90 : vector<8x4xf32> to vector<8x4xbf16>
    %92 = vector.extract_strided_slice %3 {offsets = [0, 80], sizes = [8, 4], strides = [1, 1]} : vector<8x96xf32> to vector<8x4xf32>
    %93 = arith.truncf %92 : vector<8x4xf32> to vector<8x4xbf16>
    %94 = tpu.transpose %91, [1, 0] : vector<8x4xbf16> -> vector<4x8xbf16>
    %cst_25 = arith.constant dense<0.000000e+00> : vector<8x8xf32>
    %95 = tpu.matmul %89, %94, %cst_25 {dimension_numbers = #tpu.dot_dimension_numbers<[1], [0], [0], [1], [0, 0, 1, 1], [], []>} : vector<8x4xbf16>, vector<4x8xbf16>, vector<8x8xf32> -> vector<8x8xf32>
    %cst_26 = arith.constant dense<0xFF800000> : vector<8xf32>
    %96 = vector.multi_reduction <maximumf>, %95, %cst_26 [1] : vector<8x8xf32> to vector<8xf32>
    %97 = vector.shape_cast %96 : vector<8xf32> to vector<8x1xf32>
    %98 = vector.broadcast %97 : vector<8x1xf32> to vector<8x8xf32>
    %99 = arith.subf %95, %98 : vector<8x8xf32>
    %100 = math.exp %99 : vector<8x8xf32>
    %cst_27 = arith.constant dense<0.000000e+00> : vector<8xf32>
    %101 = vector.multi_reduction <add>, %100, %cst_27 [1] : vector<8x8xf32> to vector<8xf32>
    %102 = vector.shape_cast %101 : vector<8xf32> to vector<8x1xf32>
    %103 = tpu.reciprocal %102 {approx = true} : vector<8x1xf32> -> vector<8x1xf32>
    %104 = vector.broadcast %103 : vector<8x1xf32> to vector<8x8xf32>
    %105 = arith.mulf %100, %104 : vector<8x8xf32>
    %106 = arith.truncf %105 : vector<8x8xf32> to vector<8x8xbf16>
    %cst_28 = arith.constant dense<0.000000e+00> : vector<8x4xf32>
    %107 = tpu.matmul %106, %93, %cst_28 {dimension_numbers = #tpu.dot_dimension_numbers<[1], [0], [0], [1], [0, 0, 1, 1], [], []>} : vector<8x8xbf16>, vector<8x4xbf16>, vector<8x4xf32> -> vector<8x4xf32>
    %c0_29 = arith.constant 0 : index
    %c16 = arith.constant 16 : index
    %108 = vector.load %arg6[%c0_29, %c16] : memref<8x32xf32, #tpu.memory_space<vmem>>, vector<8x4xf32>
    tpu.vector_store %arg6[%c0_29, %c16], %107 {strides = array<i32>} : memref<8x32xf32, #tpu.memory_space<vmem>>, vector<8x4xf32>,
    %109 = vector.extract_strided_slice %3 {offsets = [0, 20], sizes = [8, 4], strides = [1, 1]} : vector<8x96xf32> to vector<8x4xf32>
    %110 = arith.truncf %109 : vector<8x4xf32> to vector<8x4xbf16>
    %111 = vector.extract_strided_slice %3 {offsets = [0, 52], sizes = [8, 4], strides = [1, 1]} : vector<8x96xf32> to vector<8x4xf32>
    %112 = arith.truncf %111 : vector<8x4xf32> to vector<8x4xbf16>
    %113 = vector.extract_strided_slice %3 {offsets = [0, 84], sizes = [8, 4], strides = [1, 1]} : vector<8x96xf32> to vector<8x4xf32>
    %114 = arith.truncf %113 : vector<8x4xf32> to vector<8x4xbf16>
    %115 = tpu.transpose %112, [1, 0] : vector<8x4xbf16> -> vector<4x8xbf16>
    %cst_30 = arith.constant dense<0.000000e+00> : vector<8x8xf32>
    %116 = tpu.matmul %110, %115, %cst_30 {dimension_numbers = #tpu.dot_dimension_numbers<[1], [0], [0], [1], [0, 0, 1, 1], [], []>} : vector<8x4xbf16>, vector<4x8xbf16>, vector<8x8xf32> -> vector<8x8xf32>
    %cst_31 = arith.constant dense<0xFF800000> : vector<8xf32>
    %117 = vector.multi_reduction <maximumf>, %116, %cst_31 [1] : vector<8x8xf32> to vector<8xf32>
    %118 = vector.shape_cast %117 : vector<8xf32> to vector<8x1xf32>
    %119 = vector.broadcast %118 : vector<8x1xf32> to vector<8x8xf32>
    %120 = arith.subf %116, %119 : vector<8x8xf32>
    %121 = math.exp %120 : vector<8x8xf32>
    %cst_32 = arith.constant dense<0.000000e+00> : vector<8xf32>
    %122 = vector.multi_reduction <add>, %121, %cst_32 [1] : vector<8x8xf32> to vector<8xf32>
    %123 = vector.shape_cast %122 : vector<8xf32> to vector<8x1xf32>
    %124 = tpu.reciprocal %123 {approx = true} : vector<8x1xf32> -> vector<8x1xf32>
    %125 = vector.broadcast %124 : vector<8x1xf32> to vector<8x8xf32>
    %126 = arith.mulf %121, %125 : vector<8x8xf32>
    %127 = arith.truncf %126 : vector<8x8xf32> to vector<8x8xbf16>
    %cst_33 = arith.constant dense<0.000000e+00> : vector<8x4xf32>
    %128 = tpu.matmul %127, %114, %cst_33 {dimension_numbers = #tpu.dot_dimension_numbers<[1], [0], [0], [1], [0, 0, 1, 1], [], []>} : vector<8x8xbf16>, vector<8x4xbf16>, vector<8x4xf32> -> vector<8x4xf32>
    %c0_34 = arith.constant 0 : index
    %c20 = arith.constant 20 : index
    %129 = vector.load %arg6[%c0_34, %c20] : memref<8x32xf32, #tpu.memory_space<vmem>>, vector<8x4xf32>
    tpu.vector_store %arg6[%c0_34, %c20], %128 {strides = array<i32>} : memref<8x32xf32, #tpu.memory_space<vmem>>, vector<8x4xf32>,
    %130 = vector.extract_strided_slice %3 {offsets = [0, 24], sizes = [8, 4], strides = [1, 1]} : vector<8x96xf32> to vector<8x4xf32>
    %131 = arith.truncf %130 : vector<8x4xf32> to vector<8x4xbf16>
    %132 = vector.extract_strided_slice %3 {offsets = [0, 56], sizes = [8, 4], strides = [1, 1]} : vector<8x96xf32> to vector<8x4xf32>
    %133 = arith.truncf %132 : vector<8x4xf32> to vector<8x4xbf16>
    %134 = vector.extract_strided_slice %3 {offsets = [0, 88], sizes = [8, 4], strides = [1, 1]} : vector<8x96xf32> to vector<8x4xf32>
    %135 = arith.truncf %134 : vector<8x4xf32> to vector<8x4xbf16>
    %136 = tpu.transpose %133, [1, 0] : vector<8x4xbf16> -> vector<4x8xbf16>
    %cst_35 = arith.constant dense<0.000000e+00> : vector<8x8xf32>
    %137 = tpu.matmul %131, %136, %cst_35 {dimension_numbers = #tpu.dot_dimension_numbers<[1], [0], [0], [1], [0, 0, 1, 1], [], []>} : vector<8x4xbf16>, vector<4x8xbf16>, vector<8x8xf32> -> vector<8x8xf32>
    %cst_36 = arith.constant dense<0xFF800000> : vector<8xf32>
    %138 = vector.multi_reduction <maximumf>, %137, %cst_36 [1] : vector<8x8xf32> to vector<8xf32>
    %139 = vector.shape_cast %138 : vector<8xf32> to vector<8x1xf32>
    %140 = vector.broadcast %139 : vector<8x1xf32> to vector<8x8xf32>
    %141 = arith.subf %137, %140 : vector<8x8xf32>
    %142 = math.exp %141 : vector<8x8xf32>
    %cst_37 = arith.constant dense<0.000000e+00> : vector<8xf32>
    %143 = vector.multi_reduction <add>, %142, %cst_37 [1] : vector<8x8xf32> to vector<8xf32>
    %144 = vector.shape_cast %143 : vector<8xf32> to vector<8x1xf32>
    %145 = tpu.reciprocal %144 {approx = true} : vector<8x1xf32> -> vector<8x1xf32>
    %146 = vector.broadcast %145 : vector<8x1xf32> to vector<8x8xf32>
    %147 = arith.mulf %142, %146 : vector<8x8xf32>
    %148 = arith.truncf %147 : vector<8x8xf32> to vector<8x8xbf16>
    %cst_38 = arith.constant dense<0.000000e+00> : vector<8x4xf32>
    %149 = tpu.matmul %148, %135, %cst_38 {dimension_numbers = #tpu.dot_dimension_numbers<[1], [0], [0], [1], [0, 0, 1, 1], [], []>} : vector<8x8xbf16>, vector<8x4xbf16>, vector<8x4xf32> -> vector<8x4xf32>
    %c0_39 = arith.constant 0 : index
    %c24 = arith.constant 24 : index
    %150 = vector.load %arg6[%c0_39, %c24] : memref<8x32xf32, #tpu.memory_space<vmem>>, vector<8x4xf32>
    tpu.vector_store %arg6[%c0_39, %c24], %149 {strides = array<i32>} : memref<8x32xf32, #tpu.memory_space<vmem>>, vector<8x4xf32>,
    %151 = vector.extract_strided_slice %3 {offsets = [0, 28], sizes = [8, 4], strides = [1, 1]} : vector<8x96xf32> to vector<8x4xf32>
    %152 = arith.truncf %151 : vector<8x4xf32> to vector<8x4xbf16>
    %153 = vector.extract_strided_slice %3 {offsets = [0, 60], sizes = [8, 4], strides = [1, 1]} : vector<8x96xf32> to vector<8x4xf32>
    %154 = arith.truncf %153 : vector<8x4xf32> to vector<8x4xbf16>
    %155 = vector.extract_strided_slice %3 {offsets = [0, 92], sizes = [8, 4], strides = [1, 1]} : vector<8x96xf32> to vector<8x4xf32>
    %156 = arith.truncf %155 : vector<8x4xf32> to vector<8x4xbf16>
    %157 = tpu.transpose %154, [1, 0] : vector<8x4xbf16> -> vector<4x8xbf16>
    %cst_40 = arith.constant dense<0.000000e+00> : vector<8x8xf32>
    %158 = tpu.matmul %152, %157, %cst_40 {dimension_numbers = #tpu.dot_dimension_numbers<[1], [0], [0], [1], [0, 0, 1, 1], [], []>} : vector<8x4xbf16>, vector<4x8xbf16>, vector<8x8xf32> -> vector<8x8xf32>
    %cst_41 = arith.constant dense<0xFF800000> : vector<8xf32>
    %159 = vector.multi_reduction <maximumf>, %158, %cst_41 [1] : vector<8x8xf32> to vector<8xf32>
    %160 = vector.shape_cast %159 : vector<8xf32> to vector<8x1xf32>
    %161 = vector.broadcast %160 : vector<8x1xf32> to vector<8x8xf32>
    %162 = arith.subf %158, %161 : vector<8x8xf32>
    %163 = math.exp %162 : vector<8x8xf32>
    %cst_42 = arith.constant dense<0.000000e+00> : vector<8xf32>
    %164 = vector.multi_reduction <add>, %163, %cst_42 [1] : vector<8x8xf32> to vector<8xf32>
    %165 = vector.shape_cast %164 : vector<8xf32> to vector<8x1xf32>
    %166 = tpu.reciprocal %165 {approx = true} : vector<8x1xf32> -> vector<8x1xf32>
    %167 = vector.broadcast %166 : vector<8x1xf32> to vector<8x8xf32>
    %168 = arith.mulf %163, %167 : vector<8x8xf32>
    %169 = arith.truncf %168 : vector<8x8xf32> to vector<8x8xbf16>
    %cst_43 = arith.constant dense<0.000000e+00> : vector<8x4xf32>
    %170 = tpu.matmul %169, %156, %cst_43 {dimension_numbers = #tpu.dot_dimension_numbers<[1], [0], [0], [1], [0, 0, 1, 1], [], []>} : vector<8x8xbf16>, vector<8x4xbf16>, vector<8x4xf32> -> vector<8x4xf32>
    %c0_44 = arith.constant 0 : index
    %c28 = arith.constant 28 : index
    %171 = vector.load %arg6[%c0_44, %c28] : memref<8x32xf32, #tpu.memory_space<vmem>>, vector<8x4xf32>
    tpu.vector_store %arg6[%c0_44, %c28], %170 {strides = array<i32>} : memref<8x32xf32, #tpu.memory_space<vmem>>, vector<8x4xf32>,
    %c0_45 = arith.constant 0 : index
    %c0_46 = arith.constant 0 : index
    %172 = vector.load %arg6[%c0_45, %c0_46] : memref<8x32xf32, #tpu.memory_space<vmem>>, vector<8x32xf32>
    %173 = arith.truncf %172 : vector<8x32xf32> to vector<8x32xbf16>
    %c0_47 = arith.constant 0 : index
    %c0_48 = arith.constant 0 : index
    %174 = vector.load %arg3[%c0_47, %c0_48] : memref<32x32xbf16, #tpu.memory_space<vmem>>, vector<32x32xbf16>
    %cst_49 = arith.constant dense<0.000000e+00> : vector<8x32xf32>
    %175 = tpu.matmul %173, %174, %cst_49 {dimension_numbers = #tpu.dot_dimension_numbers<[1], [0], [0], [1], [0, 0, 1, 1], [], []>} : vector<8x32xbf16>, vector<32x32xbf16>, vector<8x32xf32> -> vector<8x32xf32>
    %c0_50 = arith.constant 0 : index
    %c0_51 = arith.constant 0 : index
    %176 = vector.load %arg4[%c0_50, %c0_51] : memref<1x32xf32, #tpu.memory_space<vmem>>, vector<1x32xf32>
    %177 = vector.broadcast %176 : vector<1x32xf32> to vector<8x32xf32>
    %178 = arith.addf %175, %177 : vector<8x32xf32>
    %c0_52 = arith.constant 0 : index
    %c0_53 = arith.constant 0 : index
    %c0_54 = arith.constant 0 : index
    %179 = vector.load %arg5[%c0_52, %c0_53, %c0_54] : memref<1x8x32xf32, #tpu.memory_space<vmem>>, vector<1x8x32xf32>
    %180 = vector.shape_cast %179 : vector<1x8x32xf32> to vector<8x32xf32>
    %181 = vector.shape_cast %178 : vector<8x32xf32> to vector<1x8x32xf32>
    tpu.vector_store %arg5[%c0_52, %c0_53, %c0_54], %181 {strides = array<i32>} : memref<1x8x32xf32, #tpu.memory_space<vmem>>, vector<1x8x32xf32>,
    return
  }
  func.func @transform_0(%arg0: i32) -> (i32, i32, i32) {
    %c0_i32 = arith.constant 0 : i32
    %c0_i32_0 = arith.constant 0 : i32
    %c0_i32_1 = arith.constant 0 : i32
    return %arg0, %c0_i32, %c0_i32_0 : i32, i32, i32
  }
  func.func @transform_1(%arg0: i32) -> (i32, i32) {
    %c0_i32 = arith.constant 0 : i32
    %c0_i32_0 = arith.constant 0 : i32
    %c0_i32_1 = arith.constant 0 : i32
    return %c0_i32, %c0_i32_0 : i32, i32
  }
  func.func @transform_2(%arg0: i32) -> (i32, i32) {
    %c0_i32 = arith.constant 0 : i32
    %c0_i32_0 = arith.constant 0 : i32
    %c0_i32_1 = arith.constant 0 : i32
    return %c0_i32, %c0_i32_0 : i32, i32
  }
  func.func @transform_3(%arg0: i32) -> (i32, i32) {
    %c0_i32 = arith.constant 0 : i32
    %c0_i32_0 = arith.constant 0 : i32
    %c0_i32_1 = arith.constant 0 : i32
    return %c0_i32, %c0_i32_0 : i32, i32
  }
  func.func @transform_4(%arg0: i32) -> (i32, i32, i32) {
    %c0_i32 = arith.constant 0 : i32
    %c0_i32_0 = arith.constant 0 : i32
    %c0_i32_1 = arith.constant 0 : i32
    return %arg0, %c0_i32, %c0_i32_0 : i32, i32, i32
  }
}

</mosaic_0001>

<llo_original>
// kernel: tpu_custom_call.1
$region0: #{tpu_custom_call.1}
  #allocation0 [shape = 'u32[]', space=smem, size = 0x4, offset = 0x4, fixed_abs, tag = 'smem constant byte address 0x4 - core index']
  #allocation1 [shape = 'u32[144,128]{1,0:T(1,128)}', space=vmem, size = 0x12000, scoped, tag = 'internal scratch']
  #allocation2 [shape = 'f32[8,32]{1,0:T(8,128)}', space=vmem, size = 0x1000, scoped, tag = 'scratch operand']
  %s0 = inlined_call_operand.hbm [shape: bf16[2,8,32], index: 0, kind: input, shape index: {}]
  %s1 = inlined_call_operand.hbm [shape: bf16[32,96], index: 1, kind: input, shape index: {}]
  %s2 = inlined_call_operand.hbm [shape: bf16[32,32], index: 2, kind: input, shape index: {}]
  %s3 = inlined_call_operand.vmem [shape: f32[1,32], index: 3, kind: input, shape index: {}]
  %s4 = inlined_call_operand.hbm [shape: f32[2,8,32], index: 4, kind: output, shape index: {}]
  %s5 = sld [smem:[#allocation0]]
  $region61: #{tpu_custom_call.1} parent=0
    _
  %s7 = ssub.s32 1, %s5
  %s8 = scalar_select 0, %s7, %s5
  $region1: #{tpu_custom_call.1} parent=0
    #allocation3 [shape = 'u8[4096]{0}', space=vmem, size = 0x1000, scoped, tag = 'input window, operand 0']
    #allocation4 [shape = 's32[2]{0}', space=sflag, size = 0x8, scoped, tag = 'scoped memory for tpu_custom_call.1']
    #allocation5 [shape = 's32[2]{0}', space=sflag, size = 0x8, scoped, tag = 'scoped memory for tpu_custom_call.1']
    #allocation6 [shape = 'u8[8192]{0}', space=vmem, size = 0x2000, scoped, tag = 'input window, operand 1, single buffered']
    #allocation7 [shape = 's32[1]{0}', space=sflag, size = 0x4, scoped, tag = 'scoped memory for tpu_custom_call.1']
    #allocation8 [shape = 'u8[8192]{0}', space=vmem, size = 0x2000, scoped, tag = 'input window, operand 2, single buffered']
    #allocation9 [shape = 'u8[8192]{0}', space=vmem, size = 0x2000, scoped, tag = 'output window, operand 0']
    %9 = vsyncpa [#allocation4], 0
    %s10 = scalar_lea.sflag [#allocation4], 1
    %11 = vsyncpa %s10, 0
    %12 = vsyncpa [#allocation7], 0
    %13 = vsyncpa [#allocation5], 0
    %s14 = scalar_lea.sflag [#allocation5], 1
    %15 = vsyncpa %s14, 0
    loop: start=0, step=1, limit=4
    $region2: #{tpu_custom_call.1} parent=1 // loop_pre_header
      _
    $region3: #{tpu_custom_call.1} parent=1 // loop_header
      %s17 = sphi 0, %s21
      %p18 = scmp.ge.s32.totalorder %s17, 4
      %s27 = sphi 0, %s29
      %s30 = sphi 0, %s27
      %s31 = sphi 0, %s30
      %s47 = sphi 0, %s31
      %s51 = sphi 0, %s51
      %s53 = sphi 0, %s51
      %s54 = sphi 0, %s53
      %s68 = sphi 0, %s54
      %s72 = sphi 0, %s72
      %s74 = sphi 0, %s72
      %s75 = sphi 0, %s74
      %s89 = sphi 0, %s75
      %s93 = sphi 0, %s93
      %s95 = sphi 0, %s93
      %s96 = sphi 0, %s95
      %s110 = sphi 0, %s96
      %s116 = sphi 0, %s118
      %s119 = sphi 0, %s116
      %s120 = sphi 0, %s119
      %s136 = sphi 0, %s120
    $region4: #{tpu_custom_call.1} parent=1 // loop_header_branch
      %20 = sbr.rel (%p18) target = $region8
    $region5: #{tpu_custom_call.1} parent=1 // loop_body
      %s22 = ssub.s32 %s17, 1
      %s23 = ssub.s32 %s17, 2
      %s24 = sadd.s32 %s17, 1
      %s25 = ssub.s32 %s17, %s24
      %p26 = scmp.eq.s32.totalorder %s25, 0
      %s28 = sadd.s32 %s27, 1
      %s29 = scalar_select %p26, %s27, %s28
      %p32 = pneg %p26
      %p33 = scmp.eq.s32.totalorder %s17, 1
      %p34 = por %p32, %p33
      %p35 = scmp.ne.s32.totalorder %s27, %s30
      %p36 = scmp.eq.s32.totalorder %s17, 0
      %p37 = por %p35, %p36
      %p38 = scmp.ne.s32.totalorder %s27, %s30
      %p39 = scmp.eq.s32.totalorder %s22, 1
      %p40 = por %p38, %p39
      %p41 = scmp.ne.s32.totalorder %s30, %s31
      %p42 = scmp.eq.s32.totalorder %s22, 0
      %p43 = por %p41, %p42
      %p44 = scmp.ne.s32.totalorder %s30, %s31
      %p45 = scmp.eq.s32.totalorder %s23, 1
      %p46 = por %p44, %p45
      %p48 = scmp.ne.s32.totalorder %s31, %s47
      %p49 = scmp.eq.s32.totalorder %s23, 0
      %p50 = por %p48, %p49
      %s52 = sadd.s32 %s51, 1
      %p55 = scmp.eq.s32.totalorder %s17, 1
      %p56 = scmp.ne.s32.totalorder %s51, %s53
      %p57 = scmp.eq.s32.totalorder %s17, 0
      %p58 = por %p56, %p57
      %p59 = scmp.ne.s32.totalorder %s51, %s53
      %p60 = scmp.eq.s32.totalorder %s22, 1
      %p61 = por %p59, %p60
      %p62 = scmp.ne.s32.totalorder %s53, %s54
      %p63 = scmp.eq.s32.totalorder %s22, 0
      %p64 = por %p62, %p63
      %p65 = scmp.ne.s32.totalorder %s53, %s54
      %p66 = scmp.eq.s32.totalorder %s23, 1
      %p67 = por %p65, %p66
      %p69 = scmp.ne.s32.totalorder %s54, %s68
      %p70 = scmp.eq.s32.totalorder %s23, 0
      %p71 = por %p69, %p70
      %s73 = sadd.s32 %s72, 1
      %p76 = scmp.eq.s32.totalorder %s17, 1
      %p77 = scmp.ne.s32.totalorder %s72, %s74
      %p78 = scmp.eq.s32.totalorder %s17, 0
      %p79 = por %p77, %p78
      %p80 = scmp.ne.s32.totalorder %s72, %s74
      %p81 = scmp.eq.s32.totalorder %s22, 1
      %p82 = por %p80, %p81
      %p83 = scmp.ne.s32.totalorder %s74, %s75
      %p84 = scmp.eq.s32.totalorder %s22, 0
      %p85 = por %p83, %p84
      %p86 = scmp.ne.s32.totalorder %s74, %s75
      %p87 = scmp.eq.s32.totalorder %s23, 1
      %p88 = por %p86, %p87
      %p90 = scmp.ne.s32.totalorder %s75, %s89
      %p91 = scmp.eq.s32.totalorder %s23, 0
      %p92 = por %p90, %p91
      %s94 = sadd.s32 %s93, 1
      %p97 = scmp.eq.s32.totalorder %s17, 1
      %p98 = scmp.ne.s32.totalorder %s93, %s95
      %p99 = scmp.eq.s32.totalorder %s17, 0
      %p100 = por %p98, %p99
      %p101 = scmp.ne.s32.totalorder %s93, %s95
      %p102 = scmp.eq.s32.totalorder %s22, 1
      %p103 = por %p101, %p102
      %p104 = scmp.ne.s32.totalorder %s95, %s96
      %p105 = scmp.eq.s32.totalorder %s22, 0
      %p106 = por %p104, %p105
      %p107 = scmp.ne.s32.totalorder %s95, %s96
      %p108 = scmp.eq.s32.totalorder %s23, 1
      %p109 = por %p107, %p108
      %p111 = scmp.ne.s32.totalorder %s96, %s110
      %p112 = scmp.eq.s32.totalorder %s23, 0
      %p113 = por %p111, %p112
      %s114 = ssub.s32 %s17, %s24
      %p115 = scmp.eq.s32.totalorder %s114, 0
      %s117 = sadd.s32 %s116, 1
      %s118 = scalar_select %p115, %s116, %s117
      %p121 = pneg %p115
      %p122 = scmp.eq.s32.totalorder %s17, 1
      %p123 = por %p121, %p122
      %p124 = scmp.ne.s32.totalorder %s116, %s119
      %p125 = scmp.eq.s32.totalorder %s17, 0
      %p126 = por %p124, %p125
      %p127 = scmp.ne.s32.totalorder %s116, %s119
      %p128 = scmp.eq.s32.totalorder %s22, 1
      %p129 = por %p127, %p128
      %p130 = scmp.ne.s32.totalorder %s119, %s120
      %p131 = scmp.eq.s32.totalorder %s22, 0
      %p132 = por %p130, %p131
      %p133 = scmp.ne.s32.totalorder %s119, %s120
      %p134 = scmp.eq.s32.totalorder %s23, 1
      %p135 = por %p133, %p134
      %p137 = scmp.ne.s32.totalorder %s120, %s136
      %p138 = scmp.eq.s32.totalorder %s23, 0
      %p139 = por %p137, %p138
      %p140 = scmp.le.s32.totalorder 1, %s17
      %p141 = scmp.lt.s32.totalorder %s17, 3
      %p142 = pnand %p140, %p141
      %p143 = pneg %p142
      // Predicated region
      $region9: #{tpu_custom_call.1} parent=5 // pred_check
        _
      $region10: #{tpu_custom_call.1} parent=5 // pred_check_branch
        %145 = sbr.rel (%p142) target = $region12
      $region11: #{tpu_custom_call.1} parent=5 // pred_region
        %s146 = ssub.s32 %s17, 1
        // Predicated region
        $region13: #{tpu_custom_call.1} parent=11 // pred_check
          %p147 = pneg %p64
        $region14: #{tpu_custom_call.1} parent=11 // pred_check_branch
          %149 = sbr.rel (%p147) target = $region16
        $region15: #{tpu_custom_call.1} parent=11 // pred_region
          %s151 = ssub.s32 256, 256
          %152 = vsyncadd [#allocation7], %s151
          %s153 = sshll.u32 [#allocation6], 4
          %s154 = int_to_ptr.vmem [resolvable:$true] %s153
          %159 = dma.hbm_to_vmem [thread:$0]  %s1, 256, %s154, [#allocation7], 64, 64, 4
        $region16: #{tpu_custom_call.1} parent=11 // pred_fallthru
          _
        // Predicated region
        $region17: #{tpu_custom_call.1} parent=11 // pred_check
          %p160 = pneg %p85
        $region18: #{tpu_custom_call.1} parent=11 // pred_check_branch
          %162 = sbr.rel (%p160) target = $region20
        $region19: #{tpu_custom_call.1} parent=11 // pred_region
          %s164 = ssub.s32 256, 256
          %165 = vsyncadd [#allocation7], %s164
          %s166 = sshll.u32 [#allocation8], 4
          %s167 = int_to_ptr.vmem [resolvable:$true] %s166
          %172 = dma.hbm_to_vmem [thread:$0]  %s2, 256, %s167, [#allocation7], 64, 64, 4
        $region20: #{tpu_custom_call.1} parent=11 // pred_fallthru
          _
        // Predicated region
        $region21: #{tpu_custom_call.1} parent=11 // pred_check
          %p173 = pneg %p106
        $region22: #{tpu_custom_call.1} parent=11 // pred_check_branch
          %175 = sbr.rel (%p173) target = $region24
        $region23: #{tpu_custom_call.1} parent=11 // pred_region
          _
        $region24: #{tpu_custom_call.1} parent=11 // pred_fallthru
          _
      $region12: #{tpu_custom_call.1} parent=5 // pred_fallthru
        _
      %p176 = scmp.lt.s32.totalorder %s17, 2
      // Predicated region
      $region25: #{tpu_custom_call.1} parent=5 // pred_check
        %p177 = pneg %p176
      $region26: #{tpu_custom_call.1} parent=5 // pred_check_branch
        %179 = sbr.rel (%p177) target = $region28
      $region27: #{tpu_custom_call.1} parent=5 // pred_region
        // Predicated region
        $region29: #{tpu_custom_call.1} parent=27 // pred_check
          %p180 = pneg %p37
        $region30: #{tpu_custom_call.1} parent=27 // pred_check_branch
          %182 = sbr.rel (%p180) target = $region32
        $region31: #{tpu_custom_call.1} parent=27 // pred_region
          %s183 = sand.u32 %s27, 1
          %s184 = scalar_lea.sflag [#allocation4], %s183
          %s185 = sand.u32 %s27, 1
          %s186 = smul.addr %s185, 4
          %s187 = scalar_lea.vmem [#allocation3], %s186
          %s189 = ssub.s32 64, 64
          %190 = vsyncadd %s184, %s189
          %s191 = smul.addr %s17, 64
          %s192 = scalar_lea.hbm %s0, %s191
          %s194 = sshll.u32 %s187, 4
          %s195 = int_to_ptr.vmem [resolvable:$true] %s194
          %197 = dma.hbm_to_vmem [thread:$0]  %s192, 64, %s195, %s184
        $region32: #{tpu_custom_call.1} parent=27 // pred_fallthru
          _
      $region28: #{tpu_custom_call.1} parent=5 // pred_fallthru
        _
      %p198 = scmp.le.s32.totalorder 1, %s17
      %p199 = scmp.lt.s32.totalorder %s17, 3
      %p200 = pnand %p198, %p199
      %p201 = pneg %p200
      // Predicated region
      $region33: #{tpu_custom_call.1} parent=5 // pred_check
        _
      $region34: #{tpu_custom_call.1} parent=5 // pred_check_branch
        %203 = sbr.rel (%p200) target = $region36
      $region35: #{tpu_custom_call.1} parent=5 // pred_region
        %s204 = ssub.s32 %s17, 1
        %s205 = sand.u32 %s30, 1
        %s206 = scalar_lea.sflag [#allocation4], %s205
        %s207 = sand.u32 %s30, 1
        %s208 = smul.addr %s207, 4
        %s209 = scalar_lea.vmem [#allocation3], %s208
        // Predicated region
        $region37: #{tpu_custom_call.1} parent=35 // pred_check
          %p210 = pneg %p43
        $region38: #{tpu_custom_call.1} parent=35 // pred_check_branch
          %212 = sbr.rel (%p210) target = $region40
        $region39: #{tpu_custom_call.1} parent=35 // pred_region
          %213 = dma.done %s206, 64
        $region40: #{tpu_custom_call.1} parent=35 // pred_fallthru
          _
        // Predicated region
        $region41: #{tpu_custom_call.1} parent=35 // pred_check
          %p214 = pneg %p64
        $region42: #{tpu_custom_call.1} parent=35 // pred_check_branch
          %216 = sbr.rel (%p214) target = $region44
        $region43: #{tpu_custom_call.1} parent=35 // pred_region
          %217 = dma.done [#allocation7], 256
        $region44: #{tpu_custom_call.1} parent=35 // pred_fallthru
          _
        // Predicated region
        $region45: #{tpu_custom_call.1} parent=35 // pred_check
          %p218 = pneg %p85
        $region46: #{tpu_custom_call.1} parent=35 // pred_check_branch
          %220 = sbr.rel (%p218) target = $region48
        $region47: #{tpu_custom_call.1} parent=35 // pred_region
          %221 = dma.done [#allocation7], 256
        $region48: #{tpu_custom_call.1} parent=35 // pred_fallthru
          _
        %s222 = sand.u32 %s30, 1
        %s223 = scalar_lea.sflag [#allocation4], %s222
        %s224 = sand.u32 %s30, 1
        %s225 = smul.addr %s224, 4
        %s226 = scalar_lea.vmem [#allocation3], %s225
        %p227 = pneg %p43
        %p228 = pneg %p40
        %p229 = pneg %p64
        %p230 = pneg %p61
        %p231 = pneg %p85
        %p232 = pneg %p82
        %p233 = pneg %p106
        %p234 = pneg %p103
        %p235 = pneg %p132
        %p236 = pneg %p129
        %s237 = sand.u32 %s119, 1
        %s238 = scalar_lea.sflag [#allocation5], %s237
        %s239 = sand.u32 %s119, 1
        %s240 = smul.addr %s239, 8
        %s241 = scalar_lea.vmem [#allocation9], %s240
        %v243 = vld [vmem:[%s209] sm:$0xf]
        %v244 = vld [vmem:[#allocation6] sm:$0xf]
        %v245 = vld [vmem:[#allocation6 + $0x4] sm:$0xf]
        %v246 = vld [vmem:[#allocation6 + $0x8] sm:$0xf]
        %v247 = vld [vmem:[#allocation6 + $0xc] sm:$0xf]
        %v252 = vunpack.c.l.b16 %v244
        %v253 = vunpack.c.l.b16 %v245
        %v254 = vunpack.c.l.b16 %v246
        %v255 = vunpack.c.l.b16 %v247
        %v256 = vpack.c.b16 %v253, %v252
        %v257 = vpack.c.b16 %v255, %v254
        %vm260 = vcmask 261120
        %v262 = vsel %vm260, %v243, 0
        %264 = vmatprep.subr.bf16.mxu0 0
        %265 = vmatpush1.bf16.msra.mxu0 %v256
        %266 = vmatprep.subr.bf16.mxu0 0
        %267 = vmatpush1.bf16.msra.mxu0 %v257
        %268 = vmatprep.subr.bf16.mxu0 0
        %269 = vmatpush1.bf16.msra.mxu0 0
        %270 = vmatprep.subr.bf16.mxu0 0
        %271 = vmatpush1.bf16.msra.mxu0 0
        %272 = vmatprep.subr.bf16.mxu0 0
        %273 = vmatpush1.bf16.msra.mxu0 0
        %274 = vmatprep.subr.bf16.mxu0 0
        %275 = vmatpush1.bf16.msra.mxu0 0
        %276 = vmatprep.subr.bf16.mxu0 0
        %277 = vmatpush1.bf16.msra.mxu0 0
        %278 = vmatprep.subr.bf16.mxu0 0
        %279 = vmatpush1.bf16.msra.mxu0 0
        %280 = vmatprep.subr.bf16.mxu0 0
        %281 = vmatpush1.bf16.msra.mxu0 0
        %282 = vmatprep.subr.bf16.mxu0 0
        %283 = vmatpush1.bf16.msra.mxu0 0
        %284 = vmatprep.subr.bf16.mxu0 0
        %285 = vmatpush1.bf16.msra.mxu0 0
        %286 = vmatprep.subr.bf16.mxu0 0
        %287 = vmatpush1.bf16.msra.mxu0 0
        %288 = vmatprep.subr.bf16.mxu0 0
        %289 = vmatpush1.bf16.msra.mxu0 0
        %290 = vmatprep.subr.bf16.mxu0 0
        %291 = vmatpush1.bf16.msra.mxu0 0
        %292 = vmatprep.subr.bf16.mxu0 0
        %293 = vmatpush1.bf16.msra.mxu0 0
        %294 = vmatprep.subr.bf16.mxu0 0
        %295 = vmatpush1.bf16.msra.mxu0 0
        %296 = vmatprep.mubr.bf16.mxu0 0
        %297 = vmatmul.mubr.bf16.gmra.mrb[0].mxu0 %v262
        %v298 = vpop.f32.mrb[0].mxu0
        %v299 = vadd.f32 0.0, %v298
        %v300 = vpop.f32.mrb[0].mxu0
        %v301 = vpop.f32.mrb[0].mxu0
        %v302 = vpop.f32.mrb[0].mxu0
        %303 = vdwg.mxu0
        %v304 = vpack.c.bf16 %v299, %v299
        %306 = vrot.lane.b32.xlu0 %v304, 96
        %v307 = vpop.permute.xlu0 %306
        %vm308 = vcmask 31744
        %v310 = vsel %vm308, %v304, 0
        %v313 = vsel %vm308, %v307, 0
        %315 = vmatprep.subr.bf16.mxu0 0
        %316 = vmatpush1.bf16.xpose.msra.mxu0 %v313
        %317 = vmatprep.subr.bf16.mxu0 0
        %318 = vmatpush1.bf16.xpose.msra.mxu0 0
        %319 = vmatprep.subr.bf16.mxu0 0
        %320 = vmatpush1.bf16.xpose.msra.mxu0 0
        %321 = vmatprep.subr.bf16.mxu0 0
        %322 = vmatpush1.bf16.xpose.msra.mxu0 0
        %323 = vmatprep.subr.bf16.mxu0 0
        %324 = vmatpush1.bf16.xpose.msra.mxu0 0
        %325 = vmatprep.subr.bf16.mxu0 0
        %326 = vmatpush1.bf16.xpose.msra.mxu0 0
        %327 = vmatprep.subr.bf16.mxu0 0
        %328 = vmatpush1.bf16.xpose.msra.mxu0 0
        %329 = vmatprep.subr.bf16.mxu0 0
        %330 = vmatpush1.bf16.xpose.msra.mxu0 0
        %331 = vmatprep.subr.bf16.mxu0 0
        %332 = vmatpush1.bf16.xpose.msra.mxu0 0
        %333 = vmatprep.subr.bf16.mxu0 0
        %334 = vmatpush1.bf16.xpose.msra.mxu0 0
        %335 = vmatprep.subr.bf16.mxu0 0
        %336 = vmatpush1.bf16.xpose.msra.mxu0 0
        %337 = vmatprep.subr.bf16.mxu0 0
        %338 = vmatpush1.bf16.xpose.msra.mxu0 0
        %339 = vmatprep.subr.bf16.mxu0 0
        %340 = vmatpush1.bf16.xpose.msra.mxu0 0
        %341 = vmatprep.subr.bf16.mxu0 0
        %342 = vmatpush1.bf16.xpose.msra.mxu0 0
        %343 = vmatprep.subr.bf16.mxu0 0
        %344 = vmatpush1.bf16.xpose.msra.mxu0 0
        %345 = vmatprep.subr.bf16.mxu0 0
        %346 = vmatpush1.bf16.xpose.msra.mxu0 0
        %347 = vmatprep.mubr.bf16.mxu0 0
        %348 = vmatmul.mubr.bf16.gmra.mrb[0].mxu0 %v310
        %v349 = vpop.f32.mrb[0].mxu0
        %v350 = vadd.f32 0.0, %v349
        %v351 = vpop.f32.mrb[0].mxu0
        %v352 = vpop.f32.mrb[0].mxu0
        %v353 = vpop.f32.mrb[0].mxu0
        %354 = vdwg.mxu0
        %vm355 = vcmask 64512
        %v356 = vsel %vm355, %v350, -inf
        %357 = vmax.xlane.f32.xlu0 %v356
        %v358 = vpop.xlane.xlu0 %357
        %v359 = vsub.f32 %v350, %v358
        %v360 = vmul.f32 %v359, 1.442695
        %v361 = vpow.pop %v360
        %v362 = vsel %vm355, %v361, 0.0
        %363 = vadd.xlane.f32.xlu0 %v362
        %v364 = vpop.xlane.xlu0 %363
        %v365 = vrcp.pop %v364
        %v366 = vmul.f32 %v361, %v365
        %v367 = vpack.c.bf16 %v366, %v366
        %368 = vrot.lane.b32.xlu0 %v304, 64
        %v369 = vpop.permute.xlu0 %368
        %v371 = vsel %vm355, %v367, 0
        %vm373 = vcmask 1043456
        %v375 = vsel %vm373, %v369, 0
        %377 = vmatprep.subr.bf16.mxu0 0
        %378 = vmatpush1.bf16.msra.mxu0 %v375
        %379 = vmatprep.subr.bf16.mxu0 0
        %380 = vmatpush1.bf16.msra.mxu0 0
        %381 = vmatprep.subr.bf16.mxu0 0
        %382 = vmatpush1.bf16.msra.mxu0 0
        %383 = vmatprep.subr.bf16.mxu0 0
        %384 = vmatpush1.bf16.msra.mxu0 0
        %385 = vmatprep.subr.bf16.mxu0 0
        %386 = vmatpush1.bf16.msra.mxu0 0
        %387 = vmatprep.subr.bf16.mxu0 0
        %388 = vmatpush1.bf16.msra.mxu0 0
        %389 = vmatprep.subr.bf16.mxu0 0
        %390 = vmatpush1.bf16.msra.mxu0 0
        %391 = vmatprep.subr.bf16.mxu0 0
        %392 = vmatpush1.bf16.msra.mxu0 0
        %393 = vmatprep.subr.bf16.mxu0 0
        %394 = vmatpush1.bf16.msra.mxu0 0
        %395 = vmatprep.subr.bf16.mxu0 0
        %396 = vmatpush1.bf16.msra.mxu0 0
        %397 = vmatprep.subr.bf16.mxu0 0
        %398 = vmatpush1.bf16.msra.mxu0 0
        %399 = vmatprep.subr.bf16.mxu0 0
        %400 = vmatpush1.bf16.msra.mxu0 0
        %401 = vmatprep.subr.bf16.mxu0 0
        %402 = vmatpush1.bf16.msra.mxu0 0
        %403 = vmatprep.subr.bf16.mxu0 0
        %404 = vmatpush1.bf16.msra.mxu0 0
        %405 = vmatprep.subr.bf16.mxu0 0
        %406 = vmatpush1.bf16.msra.mxu0 0
        %407 = vmatprep.subr.bf16.mxu0 0
        %408 = vmatpush1.bf16.msra.mxu0 0
        %409 = vmatprep.mubr.bf16.mxu0 0
        %410 = vmatmul.mubr.bf16.gmra.mrb[0].mxu0 %v371
        %v411 = vpop.f32.mrb[0].mxu0
        %v412 = vadd.f32 0.0, %v411
        %v413 = vpop.f32.mrb[0].mxu0
        %v414 = vpop.f32.mrb[0].mxu0
        %v415 = vpop.f32.mrb[0].mxu0
        %416 = vdwg.mxu0
        %417 = vst.msk [vmem:[#allocation2] sm:$0xff] %vm308, %v412
        %418 = vrot.lane.b32.xlu0 %v304, 124
        %v419 = vpop.permute.xlu0 %418
        %420 = vrot.lane.b32.xlu0 %v304, 92
        %v421 = vpop.permute.xlu0 %420
        %v423 = vsel %vm308, %v419, 0
        %v426 = vsel %vm308, %v421, 0
        %428 = vmatprep.subr.bf16.mxu0 0
        %429 = vmatpush1.bf16.xpose.msra.mxu0 %v426
        %430 = vmatprep.subr.bf16.mxu0 0
        %431 = vmatpush1.bf16.xpose.msra.mxu0 0
        %432 = vmatprep.subr.bf16.mxu0 0
        %433 = vmatpush1.bf16.xpose.msra.mxu0 0
        %434 = vmatprep.subr.bf16.mxu0 0
        %435 = vmatpush1.bf16.xpose.msra.mxu0 0
        %436 = vmatprep.subr.bf16.mxu0 0
        %437 = vmatpush1.bf16.xpose.msra.mxu0 0
        %438 = vmatprep.subr.bf16.mxu0 0
        %439 = vmatpush1.bf16.xpose.msra.mxu0 0
        %440 = vmatprep.subr.bf16.mxu0 0
        %441 = vmatpush1.bf16.xpose.msra.mxu0 0
        %442 = vmatprep.subr.bf16.mxu0 0
        %443 = vmatpush1.bf16.xpose.msra.mxu0 0
        %444 = vmatprep.subr.bf16.mxu0 0
        %445 = vmatpush1.bf16.xpose.msra.mxu0 0
        %446 = vmatprep.subr.bf16.mxu0 0
        %447 = vmatpush1.bf16.xpose.msra.mxu0 0
        %448 = vmatprep.subr.bf16.mxu0 0
        %449 = vmatpush1.bf16.xpose.msra.mxu0 0
        %450 = vmatprep.subr.bf16.mxu0 0
        %451 = vmatpush1.bf16.xpose.msra.mxu0 0
        %452 = vmatprep.subr.bf16.mxu0 0
        %453 = vmatpush1.bf16.xpose.msra.mxu0 0
        %454 = vmatprep.subr.bf16.mxu0 0
        %455 = vmatpush1.bf16.xpose.msra.mxu0 0
        %456 = vmatprep.subr.bf16.mxu0 0
        %457 = vmatpush1.bf16.xpose.msra.mxu0 0
        %458 = vmatprep.subr.bf16.mxu0 0
        %459 = vmatpush1.bf16.xpose.msra.mxu0 0
        %460 = vmatprep.mubr.bf16.mxu0 0
        %461 = vmatmul.mubr.bf16.gmra.mrb[0].mxu0 %v423
        %v462 = vpop.f32.mrb[0].mxu0
        %v463 = vadd.f32 0.0, %v462
        %v464 = vpop.f32.mrb[0].mxu0
        %v465 = vpop.f32.mrb[0].mxu0
        %v466 = vpop.f32.mrb[0].mxu0
        %467 = vdwg.mxu0
        %v468 = vsel %vm355, %v463, -inf
        %469 = vmax.xlane.f32.xlu0 %v468
        %v470 = vpop.xlane.xlu0 %469
        %v471 = vsub.f32 %v463, %v470
        %v472 = vmul.f32 %v471, 1.442695
        %v473 = vpow.pop %v472
        %v474 = vsel %vm355, %v473, 0.0
        %475 = vadd.xlane.f32.xlu0 %v474
        %v476 = vpop.xlane.xlu0 %475
        %v477 = vrcp.pop %v476
        %v478 = vmul.f32 %v473, %v477
        %v479 = vpack.c.bf16 %v478, %v478
        %480 = vrot.lane.b32.xlu0 %v304, 60
        %v481 = vpop.permute.xlu0 %480
        %v483 = vsel %vm355, %v479, 0
        %v486 = vsel %vm373, %v481, 0
        %488 = vmatprep.subr.bf16.mxu0 0
        %489 = vmatpush1.bf16.msra.mxu0 %v486
        %490 = vmatprep.subr.bf16.mxu0 0
        %491 = vmatpush1.bf16.msra.mxu0 0
        %492 = vmatprep.subr.bf16.mxu0 0
        %493 = vmatpush1.bf16.msra.mxu0 0
        %494 = vmatprep.subr.bf16.mxu0 0
        %495 = vmatpush1.bf16.msra.mxu0 0
        %496 = vmatprep.subr.bf16.mxu0 0
        %497 = vmatpush1.bf16.msra.mxu0 0
        %498 = vmatprep.subr.bf16.mxu0 0
        %499 = vmatpush1.bf16.msra.mxu0 0
        %500 = vmatprep.subr.bf16.mxu0 0
        %501 = vmatpush1.bf16.msra.mxu0 0
        %502 = vmatprep.subr.bf16.mxu0 0
        %503 = vmatpush1.bf16.msra.mxu0 0
        %504 = vmatprep.subr.bf16.mxu0 0
        %505 = vmatpush1.bf16.msra.mxu0 0
        %506 = vmatprep.subr.bf16.mxu0 0
        %507 = vmatpush1.bf16.msra.mxu0 0
        %508 = vmatprep.subr.bf16.mxu0 0
        %509 = vmatpush1.bf16.msra.mxu0 0
        %510 = vmatprep.subr.bf16.mxu0 0
        %511 = vmatpush1.bf16.msra.mxu0 0
        %512 = vmatprep.subr.bf16.mxu0 0
        %513 = vmatpush1.bf16.msra.mxu0 0
        %514 = vmatprep.subr.bf16.mxu0 0
        %515 = vmatpush1.bf16.msra.mxu0 0
        %516 = vmatprep.subr.bf16.mxu0 0
        %517 = vmatpush1.bf16.msra.mxu0 0
        %518 = vmatprep.subr.bf16.mxu0 0
        %519 = vmatpush1.bf16.msra.mxu0 0
        %520 = vmatprep.mubr.bf16.mxu0 0
        %521 = vmatmul.mubr.bf16.gmra.mrb[0].mxu0 %v483
        %v522 = vpop.f32.mrb[0].mxu0
        %v523 = vadd.f32 0.0, %v522
        %v524 = vpop.f32.mrb[0].mxu0
        %v525 = vpop.f32.mrb[0].mxu0
        %v526 = vpop.f32.mrb[0].mxu0
        %527 = vdwg.mxu0
        %529 = vrot.lane.b32.xlu0 %v523, 4
        %v530 = vpop.permute.xlu0 %529
        %vm532 = vcmask 64544
        %533 = vst.msk [vmem:[#allocation2] sm:$0xff] %vm532, %v530
        %534 = vrot.lane.b32.xlu0 %v304, 120
        %v535 = vpop.permute.xlu0 %534
        %536 = vrot.lane.b32.xlu0 %v304, 88
        %v537 = vpop.permute.xlu0 %536
        %v539 = vsel %vm308, %v535, 0
        %v542 = vsel %vm308, %v537, 0
        %544 = vmatprep.subr.bf16.mxu0 0
        %545 = vmatpush1.bf16.xpose.msra.mxu0 %v542
        %546 = vmatprep.subr.bf16.mxu0 0
        %547 = vmatpush1.bf16.xpose.msra.mxu0 0
        %548 = vmatprep.subr.bf16.mxu0 0
        %549 = vmatpush1.bf16.xpose.msra.mxu0 0
        %550 = vmatprep.subr.bf16.mxu0 0
        %551 = vmatpush1.bf16.xpose.msra.mxu0 0
        %552 = vmatprep.subr.bf16.mxu0 0
        %553 = vmatpush1.bf16.xpose.msra.mxu0 0
        %554 = vmatprep.subr.bf16.mxu0 0
        %555 = vmatpush1.bf16.xpose.msra.mxu0 0
        %556 = vmatprep.subr.bf16.mxu0 0
        %557 = vmatpush1.bf16.xpose.msra.mxu0 0
        %558 = vmatprep.subr.bf16.mxu0 0
        %559 = vmatpush1.bf16.xpose.msra.mxu0 0
        %560 = vmatprep.subr.bf16.mxu0 0
        %561 = vmatpush1.bf16.xpose.msra.mxu0 0
        %562 = vmatprep.subr.bf16.mxu0 0
        %563 = vmatpush1.bf16.xpose.msra.mxu0 0
        %564 = vmatprep.subr.bf16.mxu0 0
        %565 = vmatpush1.bf16.xpose.msra.mxu0 0
        %566 = vmatprep.subr.bf16.mxu0 0
        %567 = vmatpush1.bf16.xpose.msra.mxu0 0
        %568 = vmatprep.subr.bf16.mxu0 0
        %569 = vmatpush1.bf16.xpose.msra.mxu0 0
        %570 = vmatprep.subr.bf16.mxu0 0
        %571 = vmatpush1.bf16.xpose.msra.mxu0 0
        %572 = vmatprep.subr.bf16.mxu0 0
        %573 = vmatpush1.bf16.xpose.msra.mxu0 0
        %574 = vmatprep.subr.bf16.mxu0 0
        %575 = vmatpush1.bf16.xpose.msra.mxu0 0
        %576 = vmatprep.mubr.bf16.mxu0 0
        %577 = vmatmul.mubr.bf16.gmra.mrb[0].mxu0 %v539
        %v578 = vpop.f32.mrb[0].mxu0
        %v579 = vadd.f32 0.0, %v578
        %v580 = vpop.f32.mrb[0].mxu0
        %v581 = vpop.f32.mrb[0].mxu0
        %v582 = vpop.f32.mrb[0].mxu0
        %583 = vdwg.mxu0
        %v584 = vsel %vm355, %v579, -inf
        %585 = vmax.xlane.f32.xlu0 %v584
        %v586 = vpop.xlane.xlu0 %585
        %v587 = vsub.f32 %v579, %v586
        %v588 = vmul.f32 %v587, 1.442695
        %v589 = vpow.pop %v588
        %v590 = vsel %vm355, %v589, 0.0
        %591 = vadd.xlane.f32.xlu0 %v590
        %v592 = vpop.xlane.xlu0 %591
        %v593 = vrcp.pop %v592
        %v594 = vmul.f32 %v589, %v593
        %v595 = vpack.c.bf16 %v594, %v594
        %596 = vrot.lane.b32.xlu0 %v304, 56
        %v597 = vpop.permute.xlu0 %596
        %v599 = vsel %vm355, %v595, 0
        %v602 = vsel %vm373, %v597, 0
        %604 = vmatprep.subr.bf16.mxu0 0
        %605 = vmatpush1.bf16.msra.mxu0 %v602
        %606 = vmatprep.subr.bf16.mxu0 0
        %607 = vmatpush1.bf16.msra.mxu0 0
        %608 = vmatprep.subr.bf16.mxu0 0
        %609 = vmatpush1.bf16.msra.mxu0 0
        %610 = vmatprep.subr.bf16.mxu0 0
        %611 = vmatpush1.bf16.msra.mxu0 0
        %612 = vmatprep.subr.bf16.mxu0 0
        %613 = vmatpush1.bf16.msra.mxu0 0
        %614 = vmatprep.subr.bf16.mxu0 0
        %615 = vmatpush1.bf16.msra.mxu0 0
        %616 = vmatprep.subr.bf16.mxu0 0
        %617 = vmatpush1.bf16.msra.mxu0 0
        %618 = vmatprep.subr.bf16.mxu0 0
        %619 = vmatpush1.bf16.msra.mxu0 0
        %620 = vmatprep.subr.bf16.mxu0 0
        %621 = vmatpush1.bf16.msra.mxu0 0
        %622 = vmatprep.subr.bf16.mxu0 0
        %623 = vmatpush1.bf16.msra.mxu0 0
        %624 = vmatprep.subr.bf16.mxu0 0
        %625 = vmatpush1.bf16.msra.mxu0 0
        %626 = vmatprep.subr.bf16.mxu0 0
        %627 = vmatpush1.bf16.msra.mxu0 0
        %628 = vmatprep.subr.bf16.mxu0 0
        %629 = vmatpush1.bf16.msra.mxu0 0
        %630 = vmatprep.subr.bf16.mxu0 0
        %631 = vmatpush1.bf16.msra.mxu0 0
        %632 = vmatprep.subr.bf16.mxu0 0
        %633 = vmatpush1.bf16.msra.mxu0 0
        %634 = vmatprep.subr.bf16.mxu0 0
        %635 = vmatpush1.bf16.msra.mxu0 0
        %636 = vmatprep.mubr.bf16.mxu0 0
        %637 = vmatmul.mubr.bf16.gmra.mrb[0].mxu0 %v599
        %v638 = vpop.f32.mrb[0].mxu0
        %v639 = vadd.f32 0.0, %v638
        %v640 = vpop.f32.mrb[0].mxu0
        %v641 = vpop.f32.mrb[0].mxu0
        %v642 = vpop.f32.mrb[0].mxu0
        %643 = vdwg.mxu0
        %645 = vrot.lane.b32.xlu0 %v639, 8
        %v646 = vpop.permute.xlu0 %645
        %vm648 = vcmask 97344
        %649 = vst.msk [vmem:[#allocation2] sm:$0xff] %vm648, %v646
        %650 = vrot.lane.b32.xlu0 %v304, 116
        %v651 = vpop.permute.xlu0 %650
        %652 = vrot.lane.b32.xlu0 %v304, 84
        %v653 = vpop.permute.xlu0 %652
        %v655 = vsel %vm308, %v651, 0
        %v658 = vsel %vm308, %v653, 0
        %660 = vmatprep.subr.bf16.mxu0 0
        %661 = vmatpush1.bf16.xpose.msra.mxu0 %v658
        %662 = vmatprep.subr.bf16.mxu0 0
        %663 = vmatpush1.bf16.xpose.msra.mxu0 0
        %664 = vmatprep.subr.bf16.mxu0 0
        %665 = vmatpush1.bf16.xpose.msra.mxu0 0
        %666 = vmatprep.subr.bf16.mxu0 0
        %667 = vmatpush1.bf16.xpose.msra.mxu0 0
        %668 = vmatprep.subr.bf16.mxu0 0
        %669 = vmatpush1.bf16.xpose.msra.mxu0 0
        %670 = vmatprep.subr.bf16.mxu0 0
        %671 = vmatpush1.bf16.xpose.msra.mxu0 0
        %672 = vmatprep.subr.bf16.mxu0 0
        %673 = vmatpush1.bf16.xpose.msra.mxu0 0
        %674 = vmatprep.subr.bf16.mxu0 0
        %675 = vmatpush1.bf16.xpose.msra.mxu0 0
        %676 = vmatprep.subr.bf16.mxu0 0
        %677 = vmatpush1.bf16.xpose.msra.mxu0 0
        %678 = vmatprep.subr.bf16.mxu0 0
        %679 = vmatpush1.bf16.xpose.msra.mxu0 0
        %680 = vmatprep.subr.bf16.mxu0 0
        %681 = vmatpush1.bf16.xpose.msra.mxu0 0
        %682 = vmatprep.subr.bf16.mxu0 0
        %683 = vmatpush1.bf16.xpose.msra.mxu0 0
        %684 = vmatprep.subr.bf16.mxu0 0
        %685 = vmatpush1.bf16.xpose.msra.mxu0 0
        %686 = vmatprep.subr.bf16.mxu0 0
        %687 = vmatpush1.bf16.xpose.msra.mxu0 0
        %688 = vmatprep.subr.bf16.mxu0 0
        %689 = vmatpush1.bf16.xpose.msra.mxu0 0
        %690 = vmatprep.subr.bf16.mxu0 0
        %691 = vmatpush1.bf16.xpose.msra.mxu0 0
        %692 = vmatprep.mubr.bf16.mxu0 0
        %693 = vmatmul.mubr.bf16.gmra.mrb[0].mxu0 %v655
        %v694 = vpop.f32.mrb[0].mxu0
        %v695 = vadd.f32 0.0, %v694
        %v696 = vpop.f32.mrb[0].mxu0
        %v697 = vpop.f32.mrb[0].mxu0
        %v698 = vpop.f32.mrb[0].mxu0
        %699 = vdwg.mxu0
        %v700 = vsel %vm355, %v695, -inf
        %701 = vmax.xlane.f32.xlu0 %v700
        %v702 = vpop.xlane.xlu0 %701
        %v703 = vsub.f32 %v695, %v702
        %v704 = vmul.f32 %v703, 1.442695
        %v705 = vpow.pop %v704
        %v706 = vsel %vm355, %v705, 0.0
        %707 = vadd.xlane.f32.xlu0 %v706
        %v708 = vpop.xlane.xlu0 %707
        %v709 = vrcp.pop %v708
        %v710 = vmul.f32 %v705, %v709
        %v711 = vpack.c.bf16 %v710, %v710
        %712 = vrot.lane.b32.xlu0 %v304, 52
        %v713 = vpop.permute.xlu0 %712
        %v715 = vsel %vm355, %v711, 0
        %v718 = vsel %vm373, %v713, 0
        %720 = vmatprep.subr.bf16.mxu0 0
        %721 = vmatpush1.bf16.msra.mxu0 %v718
        %722 = vmatprep.subr.bf16.mxu0 0
        %723 = vmatpush1.bf16.msra.mxu0 0
        %724 = vmatprep.subr.bf16.mxu0 0
        %725 = vmatpush1.bf16.msra.mxu0 0
        %726 = vmatprep.subr.bf16.mxu0 0
        %727 = vmatpush1.bf16.msra.mxu0 0
        %728 = vmatprep.subr.bf16.mxu0 0
        %729 = vmatpush1.bf16.msra.mxu0 0
        %730 = vmatprep.subr.bf16.mxu0 0
        %731 = vmatpush1.bf16.msra.mxu0 0
        %732 = vmatprep.subr.bf16.mxu0 0
        %733 = vmatpush1.bf16.msra.mxu0 0
        %734 = vmatprep.subr.bf16.mxu0 0
        %735 = vmatpush1.bf16.msra.mxu0 0
        %736 = vmatprep.subr.bf16.mxu0 0
        %737 = vmatpush1.bf16.msra.mxu0 0
        %738 = vmatprep.subr.bf16.mxu0 0
        %739 = vmatpush1.bf16.msra.mxu0 0
        %740 = vmatprep.subr.bf16.mxu0 0
        %741 = vmatpush1.bf16.msra.mxu0 0
        %742 = vmatprep.subr.bf16.mxu0 0
        %743 = vmatpush1.bf16.msra.mxu0 0
        %744 = vmatprep.subr.bf16.mxu0 0
        %745 = vmatpush1.bf16.msra.mxu0 0
        %746 = vmatprep.subr.bf16.mxu0 0
        %747 = vmatpush1.bf16.msra.mxu0 0
        %748 = vmatprep.subr.bf16.mxu0 0
        %749 = vmatpush1.bf16.msra.mxu0 0
        %750 = vmatprep.subr.bf16.mxu0 0
        %751 = vmatpush1.bf16.msra.mxu0 0
        %752 = vmatprep.mubr.bf16.mxu0 0
        %753 = vmatmul.mubr.bf16.gmra.mrb[0].mxu0 %v715
        %v754 = vpop.f32.mrb[0].mxu0
        %v755 = vadd.f32 0.0, %v754
        %v756 = vpop.f32.mrb[0].mxu0
        %v757 = vpop.f32.mrb[0].mxu0
        %v758 = vpop.f32.mrb[0].mxu0
        %759 = vdwg.mxu0
        %761 = vrot.lane.b32.xlu0 %v755, 12
        %v762 = vpop.permute.xlu0 %761
        %vm764 = vcmask 130144
        %765 = vst.msk [vmem:[#allocation2] sm:$0xff] %vm764, %v762
        %766 = vrot.lane.b32.xlu0 %v304, 112
        %v767 = vpop.permute.xlu0 %766
        %768 = vrot.lane.b32.xlu0 %v304, 80
        %v769 = vpop.permute.xlu0 %768
        %v771 = vsel %vm308, %v767, 0
        %v774 = vsel %vm308, %v769, 0
        %776 = vmatprep.subr.bf16.mxu0 0
        %777 = vmatpush1.bf16.xpose.msra.mxu0 %v774
        %778 = vmatprep.subr.bf16.mxu0 0
        %779 = vmatpush1.bf16.xpose.msra.mxu0 0
        %780 = vmatprep.subr.bf16.mxu0 0
        %781 = vmatpush1.bf16.xpose.msra.mxu0 0
        %782 = vmatprep.subr.bf16.mxu0 0
        %783 = vmatpush1.bf16.xpose.msra.mxu0 0
        %784 = vmatprep.subr.bf16.mxu0 0
        %785 = vmatpush1.bf16.xpose.msra.mxu0 0
        %786 = vmatprep.subr.bf16.mxu0 0
        %787 = vmatpush1.bf16.xpose.msra.mxu0 0
        %788 = vmatprep.subr.bf16.mxu0 0
        %789 = vmatpush1.bf16.xpose.msra.mxu0 0
        %790 = vmatprep.subr.bf16.mxu0 0
        %791 = vmatpush1.bf16.xpose.msra.mxu0 0
        %792 = vmatprep.subr.bf16.mxu0 0
        %793 = vmatpush1.bf16.xpose.msra.mxu0 0
        %794 = vmatprep.subr.bf16.mxu0 0
        %795 = vmatpush1.bf16.xpose.msra.mxu0 0
        %796 = vmatprep.subr.bf16.mxu0 0
        %797 = vmatpush1.bf16.xpose.msra.mxu0 0
        %798 = vmatprep.subr.bf16.mxu0 0
        %799 = vmatpush1.bf16.xpose.msra.mxu0 0
        %800 = vmatprep.subr.bf16.mxu0 0
        %801 = vmatpush1.bf16.xpose.msra.mxu0 0
        %802 = vmatprep.subr.bf16.mxu0 0
        %803 = vmatpush1.bf16.xpose.msra.mxu0 0
        %804 = vmatprep.subr.bf16.mxu0 0
        %805 = vmatpush1.bf16.xpose.msra.mxu0 0
        %806 = vmatprep.subr.bf16.mxu0 0
        %807 = vmatpush1.bf16.xpose.msra.mxu0 0
        %808 = vmatprep.mubr.bf16.mxu0 0
        %809 = vmatmul.mubr.bf16.gmra.mrb[0].mxu0 %v771
        %v810 = vpop.f32.mrb[0].mxu0
        %v811 = vadd.f32 0.0, %v810
        %v812 = vpop.f32.mrb[0].mxu0
        %v813 = vpop.f32.mrb[0].mxu0
        %v814 = vpop.f32.mrb[0].mxu0
        %815 = vdwg.mxu0
        %v816 = vsel %vm355, %v811, -inf
        %817 = vmax.xlane.f32.xlu0 %v816
        %v818 = vpop.xlane.xlu0 %817
        %v819 = vsub.f32 %v811, %v818
        %v820 = vmul.f32 %v819, 1.442695
        %v821 = vpow.pop %v820
        %v822 = vsel %vm355, %v821, 0.0
        %823 = vadd.xlane.f32.xlu0 %v822
        %v824 = vpop.xlane.xlu0 %823
        %v825 = vrcp.pop %v824
        %v826 = vmul.f32 %v821, %v825
        %v827 = vpack.c.bf16 %v826, %v826
        %828 = vrot.lane.b32.xlu0 %v304, 48
        %v829 = vpop.permute.xlu0 %828
        %v831 = vsel %vm355, %v827, 0
        %v834 = vsel %vm373, %v829, 0
        %836 = vmatprep.subr.bf16.mxu0 0
        %837 = vmatpush1.bf16.msra.mxu0 %v834
        %838 = vmatprep.subr.bf16.mxu0 0
        %839 = vmatpush1.bf16.msra.mxu0 0
        %840 = vmatprep.subr.bf16.mxu0 0
        %841 = vmatpush1.bf16.msra.mxu0 0
        %842 = vmatprep.subr.bf16.mxu0 0
        %843 = vmatpush1.bf16.msra.mxu0 0
        %844 = vmatprep.subr.bf16.mxu0 0
        %845 = vmatpush1.bf16.msra.mxu0 0
        %846 = vmatprep.subr.bf16.mxu0 0
        %847 = vmatpush1.bf16.msra.mxu0 0
        %848 = vmatprep.subr.bf16.mxu0 0
        %849 = vmatpush1.bf16.msra.mxu0 0
        %850 = vmatprep.subr.bf16.mxu0 0
        %851 = vmatpush1.bf16.msra.mxu0 0
        %852 = vmatprep.subr.bf16.mxu0 0
        %853 = vmatpush1.bf16.msra.mxu0 0
        %854 = vmatprep.subr.bf16.mxu0 0
        %855 = vmatpush1.bf16.msra.mxu0 0
        %856 = vmatprep.subr.bf16.mxu0 0
        %857 = vmatpush1.bf16.msra.mxu0 0
        %858 = vmatprep.subr.bf16.mxu0 0
        %859 = vmatpush1.bf16.msra.mxu0 0
        %860 = vmatprep.subr.bf16.mxu0 0
        %861 = vmatpush1.bf16.msra.mxu0 0
        %862 = vmatprep.subr.bf16.mxu0 0
        %863 = vmatpush1.bf16.msra.mxu0 0
        %864 = vmatprep.subr.bf16.mxu0 0
        %865 = vmatpush1.bf16.msra.mxu0 0
        %866 = vmatprep.subr.bf16.mxu0 0
        %867 = vmatpush1.bf16.msra.mxu0 0
        %868 = vmatprep.mubr.bf16.mxu0 0
        %869 = vmatmul.mubr.bf16.gmra.mrb[0].mxu0 %v831
        %v870 = vpop.f32.mrb[0].mxu0
        %v871 = vadd.f32 0.0, %v870
        %v872 = vpop.f32.mrb[0].mxu0
        %v873 = vpop.f32.mrb[0].mxu0
        %v874 = vpop.f32.mrb[0].mxu0
        %875 = vdwg.mxu0
        %877 = vrot.lane.b32.xlu0 %v871, 16
        %v878 = vpop.permute.xlu0 %877
        %vm880 = vcmask 162944
        %881 = vst.msk [vmem:[#allocation2] sm:$0xff] %vm880, %v878
        %882 = vrot.lane.b32.xlu0 %v304, 108
        %v883 = vpop.permute.xlu0 %882
        %884 = vrot.lane.b32.xlu0 %v304, 76
        %v885 = vpop.permute.xlu0 %884
        %v887 = vsel %vm308, %v883, 0
        %v890 = vsel %vm308, %v885, 0
        %892 = vmatprep.subr.bf16.mxu0 0
        %893 = vmatpush1.bf16.xpose.msra.mxu0 %v890
        %894 = vmatprep.subr.bf16.mxu0 0
        %895 = vmatpush1.bf16.xpose.msra.mxu0 0
        %896 = vmatprep.subr.bf16.mxu0 0
        %897 = vmatpush1.bf16.xpose.msra.mxu0 0
        %898 = vmatprep.subr.bf16.mxu0 0
        %899 = vmatpush1.bf16.xpose.msra.mxu0 0
        %900 = vmatprep.subr.bf16.mxu0 0
        %901 = vmatpush1.bf16.xpose.msra.mxu0 0
        %902 = vmatprep.subr.bf16.mxu0 0
        %903 = vmatpush1.bf16.xpose.msra.mxu0 0
        %904 = vmatprep.subr.bf16.mxu0 0
        %905 = vmatpush1.bf16.xpose.msra.mxu0 0
        %906 = vmatprep.subr.bf16.mxu0 0
        %907 = vmatpush1.bf16.xpose.msra.mxu0 0
        %908 = vmatprep.subr.bf16.mxu0 0
        %909 = vmatpush1.bf16.xpose.msra.mxu0 0
        %910 = vmatprep.subr.bf16.mxu0 0
        %911 = vmatpush1.bf16.xpose.msra.mxu0 0
        %912 = vmatprep.subr.bf16.mxu0 0
        %913 = vmatpush1.bf16.xpose.msra.mxu0 0
        %914 = vmatprep.subr.bf16.mxu0 0
        %915 = vmatpush1.bf16.xpose.msra.mxu0 0
        %916 = vmatprep.subr.bf16.mxu0 0
        %917 = vmatpush1.bf16.xpose.msra.mxu0 0
        %918 = vmatprep.subr.bf16.mxu0 0
        %919 = vmatpush1.bf16.xpose.msra.mxu0 0
        %920 = vmatprep.subr.bf16.mxu0 0
        %921 = vmatpush1.bf16.xpose.msra.mxu0 0
        %922 = vmatprep.subr.bf16.mxu0 0
        %923 = vmatpush1.bf16.xpose.msra.mxu0 0
        %924 = vmatprep.mubr.bf16.mxu0 0
        %925 = vmatmul.mubr.bf16.gmra.mrb[0].mxu0 %v887
        %v926 = vpop.f32.mrb[0].mxu0
        %v927 = vadd.f32 0.0, %v926
        %v928 = vpop.f32.mrb[0].mxu0
        %v929 = vpop.f32.mrb[0].mxu0
        %v930 = vpop.f32.mrb[0].mxu0
        %931 = vdwg.mxu0
        %v932 = vsel %vm355, %v927, -inf
        %933 = vmax.xlane.f32.xlu0 %v932
        %v934 = vpop.xlane.xlu0 %933
        %v935 = vsub.f32 %v927, %v934
        %v936 = vmul.f32 %v935, 1.442695
        %v937 = vpow.pop %v936
        %v938 = vsel %vm355, %v937, 0.0
        %939 = vadd.xlane.f32.xlu0 %v938
        %v940 = vpop.xlane.xlu0 %939
        %v941 = vrcp.pop %v940
        %v942 = vmul.f32 %v937, %v941
        %v943 = vpack.c.bf16 %v942, %v942
        %944 = vrot.lane.b32.xlu0 %v304, 44
        %v945 = vpop.permute.xlu0 %944
        %v947 = vsel %vm355, %v943, 0
        %v950 = vsel %vm373, %v945, 0
        %952 = vmatprep.subr.bf16.mxu0 0
        %953 = vmatpush1.bf16.msra.mxu0 %v950
        %954 = vmatprep.subr.bf16.mxu0 0
        %955 = vmatpush1.bf16.msra.mxu0 0
        %956 = vmatprep.subr.bf16.mxu0 0
        %957 = vmatpush1.bf16.msra.mxu0 0
        %958 = vmatprep.subr.bf16.mxu0 0
        %959 = vmatpush1.bf16.msra.mxu0 0
        %960 = vmatprep.subr.bf16.mxu0 0
        %961 = vmatpush1.bf16.msra.mxu0 0
        %962 = vmatprep.subr.bf16.mxu0 0
        %963 = vmatpush1.bf16.msra.mxu0 0
        %964 = vmatprep.subr.bf16.mxu0 0
        %965 = vmatpush1.bf16.msra.mxu0 0
        %966 = vmatprep.subr.bf16.mxu0 0
        %967 = vmatpush1.bf16.msra.mxu0 0
        %968 = vmatprep.subr.bf16.mxu0 0
        %969 = vmatpush1.bf16.msra.mxu0 0
        %970 = vmatprep.subr.bf16.mxu0 0
        %971 = vmatpush1.bf16.msra.mxu0 0
        %972 = vmatprep.subr.bf16.mxu0 0
        %973 = vmatpush1.bf16.msra.mxu0 0
        %974 = vmatprep.subr.bf16.mxu0 0
        %975 = vmatpush1.bf16.msra.mxu0 0
        %976 = vmatprep.subr.bf16.mxu0 0
        %977 = vmatpush1.bf16.msra.mxu0 0
        %978 = vmatprep.subr.bf16.mxu0 0
        %979 = vmatpush1.bf16.msra.mxu0 0
        %980 = vmatprep.subr.bf16.mxu0 0
        %981 = vmatpush1.bf16.msra.mxu0 0
        %982 = vmatprep.subr.bf16.mxu0 0
        %983 = vmatpush1.bf16.msra.mxu0 0
        %984 = vmatprep.mubr.bf16.mxu0 0
        %985 = vmatmul.mubr.bf16.gmra.mrb[0].mxu0 %v947
        %v986 = vpop.f32.mrb[0].mxu0
        %v987 = vadd.f32 0.0, %v986
        %v988 = vpop.f32.mrb[0].mxu0
        %v989 = vpop.f32.mrb[0].mxu0
        %v990 = vpop.f32.mrb[0].mxu0
        %991 = vdwg.mxu0
        %993 = vrot.lane.b32.xlu0 %v987, 20
        %v994 = vpop.permute.xlu0 %993
        %vm996 = vcmask 195744
        %997 = vst.msk [vmem:[#allocation2] sm:$0xff] %vm996, %v994
        %998 = vrot.lane.b32.xlu0 %v304, 104
        %v999 = vpop.permute.xlu0 %998
        %1000 = vrot.lane.b32.xlu0 %v304, 72
        %v1001 = vpop.permute.xlu0 %1000
        %v1003 = vsel %vm308, %v999, 0
        %v1006 = vsel %vm308, %v1001, 0
        %1008 = vmatprep.subr.bf16.mxu0 0
        %1009 = vmatpush1.bf16.xpose.msra.mxu0 %v1006
        %1010 = vmatprep.subr.bf16.mxu0 0
        %1011 = vmatpush1.bf16.xpose.msra.mxu0 0
        %1012 = vmatprep.subr.bf16.mxu0 0
        %1013 = vmatpush1.bf16.xpose.msra.mxu0 0
        %1014 = vmatprep.subr.bf16.mxu0 0
        %1015 = vmatpush1.bf16.xpose.msra.mxu0 0
        %1016 = vmatprep.subr.bf16.mxu0 0
        %1017 = vmatpush1.bf16.xpose.msra.mxu0 0
        %1018 = vmatprep.subr.bf16.mxu0 0
        %1019 = vmatpush1.bf16.xpose.msra.mxu0 0
        %1020 = vmatprep.subr.bf16.mxu0 0
        %1021 = vmatpush1.bf16.xpose.msra.mxu0 0
        %1022 = vmatprep.subr.bf16.mxu0 0
        %1023 = vmatpush1.bf16.xpose.msra.mxu0 0
        %1024 = vmatprep.subr.bf16.mxu0 0
        %1025 = vmatpush1.bf16.xpose.msra.mxu0 0
        %1026 = vmatprep.subr.bf16.mxu0 0
        %1027 = vmatpush1.bf16.xpose.msra.mxu0 0
        %1028 = vmatprep.subr.bf16.mxu0 0
        %1029 = vmatpush1.bf16.xpose.msra.mxu0 0
        %1030 = vmatprep.subr.bf16.mxu0 0
        %1031 = vmatpush1.bf16.xpose.msra.mxu0 0
        %1032 = vmatprep.subr.bf16.mxu0 0
        %1033 = vmatpush1.bf16.xpose.msra.mxu0 0
        %1034 = vmatprep.subr.bf16.mxu0 0
        %1035 = vmatpush1.bf16.xpose.msra.mxu0 0
        %1036 = vmatprep.subr.bf16.mxu0 0
        %1037 = vmatpush1.bf16.xpose.msra.mxu0 0
        %1038 = vmatprep.subr.bf16.mxu0 0
        %1039 = vmatpush1.bf16.xpose.msra.mxu0 0
        %1040 = vmatprep.mubr.bf16.mxu0 0
        %1041 = vmatmul.mubr.bf16.gmra.mrb[0].mxu0 %v1003
        %v1042 = vpop.f32.mrb[0].mxu0
        %v1043 = vadd.f32 0.0, %v1042
        %v1044 = vpop.f32.mrb[0].mxu0
        %v1045 = vpop.f32.mrb[0].mxu0
        %v1046 = vpop.f32.mrb[0].mxu0
        %1047 = vdwg.mxu0
        %v1048 = vsel %vm355, %v1043, -inf
        %1049 = vmax.xlane.f32.xlu0 %v1048
        %v1050 = vpop.xlane.xlu0 %1049
        %v1051 = vsub.f32 %v1043, %v1050
        %v1052 = vmul.f32 %v1051, 1.442695
        %v1053 = vpow.pop %v1052
        %v1054 = vsel %vm355, %v1053, 0.0
        %1055 = vadd.xlane.f32.xlu0 %v1054
        %v1056 = vpop.xlane.xlu0 %1055
        %v1057 = vrcp.pop %v1056
        %v1058 = vmul.f32 %v1053, %v1057
        %v1059 = vpack.c.bf16 %v1058, %v1058
        %1060 = vrot.lane.b32.xlu0 %v304, 40
        %v1061 = vpop.permute.xlu0 %1060
        %v1063 = vsel %vm355, %v1059, 0
        %v1066 = vsel %vm373, %v1061, 0
        %1068 = vmatprep.subr.bf16.mxu0 0
        %1069 = vmatpush1.bf16.msra.mxu0 %v1066
        %1070 = vmatprep.subr.bf16.mxu0 0
        %1071 = vmatpush1.bf16.msra.mxu0 0
        %1072 = vmatprep.subr.bf16.mxu0 0
        %1073 = vmatpush1.bf16.msra.mxu0 0
        %1074 = vmatprep.subr.bf16.mxu0 0
        %1075 = vmatpush1.bf16.msra.mxu0 0
        %1076 = vmatprep.subr.bf16.mxu0 0
        %1077 = vmatpush1.bf16.msra.mxu0 0
        %1078 = vmatprep.subr.bf16.mxu0 0
        %1079 = vmatpush1.bf16.msra.mxu0 0
        %1080 = vmatprep.subr.bf16.mxu0 0
        %1081 = vmatpush1.bf16.msra.mxu0 0
        %1082 = vmatprep.subr.bf16.mxu0 0
        %1083 = vmatpush1.bf16.msra.mxu0 0
        %1084 = vmatprep.subr.bf16.mxu0 0
        %1085 = vmatpush1.bf16.msra.mxu0 0
        %1086 = vmatprep.subr.bf16.mxu0 0
        %1087 = vmatpush1.bf16.msra.mxu0 0
        %1088 = vmatprep.subr.bf16.mxu0 0
        %1089 = vmatpush1.bf16.msra.mxu0 0
        %1090 = vmatprep.subr.bf16.mxu0 0
        %1091 = vmatpush1.bf16.msra.mxu0 0
        %1092 = vmatprep.subr.bf16.mxu0 0
        %1093 = vmatpush1.bf16.msra.mxu0 0
        %1094 = vmatprep.subr.bf16.mxu0 0
        %1095 = vmatpush1.bf16.msra.mxu0 0
        %1096 = vmatprep.subr.bf16.mxu0 0
        %1097 = vmatpush1.bf16.msra.mxu0 0
        %1098 = vmatprep.subr.bf16.mxu0 0
        %1099 = vmatpush1.bf16.msra.mxu0 0
        %1100 = vmatprep.mubr.bf16.mxu0 0
        %1101 = vmatmul.mubr.bf16.gmra.mrb[0].mxu0 %v1063
        %v1102 = vpop.f32.mrb[0].mxu0
        %v1103 = vadd.f32 0.0, %v1102
        %v1104 = vpop.f32.mrb[0].mxu0
        %v1105 = vpop.f32.mrb[0].mxu0
        %v1106 = vpop.f32.mrb[0].mxu0
        %1107 = vdwg.mxu0
        %1109 = vrot.lane.b32.xlu0 %v1103, 24
        %v1110 = vpop.permute.xlu0 %1109
        %vm1112 = vcmask 228544
        %1113 = vst.msk [vmem:[#allocation2] sm:$0xff] %vm1112, %v1110
        %1114 = vrot.lane.b32.xlu0 %v304, 100
        %v1115 = vpop.permute.xlu0 %1114
        %1116 = vrot.lane.b32.xlu0 %v304, 68
        %v1117 = vpop.permute.xlu0 %1116
        %v1119 = vsel %vm308, %v1115, 0
        %v1122 = vsel %vm308, %v1117, 0
        %1124 = vmatprep.subr.bf16.mxu0 0
        %1125 = vmatpush1.bf16.xpose.msra.mxu0 %v1122
        %1126 = vmatprep.subr.bf16.mxu0 0
        %1127 = vmatpush1.bf16.xpose.msra.mxu0 0
        %1128 = vmatprep.subr.bf16.mxu0 0
        %1129 = vmatpush1.bf16.xpose.msra.mxu0 0
        %1130 = vmatprep.subr.bf16.mxu0 0
        %1131 = vmatpush1.bf16.xpose.msra.mxu0 0
        %1132 = vmatprep.subr.bf16.mxu0 0
        %1133 = vmatpush1.bf16.xpose.msra.mxu0 0
        %1134 = vmatprep.subr.bf16.mxu0 0
        %1135 = vmatpush1.bf16.xpose.msra.mxu0 0
        %1136 = vmatprep.subr.bf16.mxu0 0
        %1137 = vmatpush1.bf16.xpose.msra.mxu0 0
        %1138 = vmatprep.subr.bf16.mxu0 0
        %1139 = vmatpush1.bf16.xpose.msra.mxu0 0
        %1140 = vmatprep.subr.bf16.mxu0 0
        %1141 = vmatpush1.bf16.xpose.msra.mxu0 0
        %1142 = vmatprep.subr.bf16.mxu0 0
        %1143 = vmatpush1.bf16.xpose.msra.mxu0 0
        %1144 = vmatprep.subr.bf16.mxu0 0
        %1145 = vmatpush1.bf16.xpose.msra.mxu0 0
        %1146 = vmatprep.subr.bf16.mxu0 0
        %1147 = vmatpush1.bf16.xpose.msra.mxu0 0
        %1148 = vmatprep.subr.bf16.mxu0 0
        %1149 = vmatpush1.bf16.xpose.msra.mxu0 0
        %1150 = vmatprep.subr.bf16.mxu0 0
        %1151 = vmatpush1.bf16.xpose.msra.mxu0 0
        %1152 = vmatprep.subr.bf16.mxu0 0
        %1153 = vmatpush1.bf16.xpose.msra.mxu0 0
        %1154 = vmatprep.subr.bf16.mxu0 0
        %1155 = vmatpush1.bf16.xpose.msra.mxu0 0
        %1156 = vmatprep.mubr.bf16.mxu0 0
        %1157 = vmatmul.mubr.bf16.gmra.mrb[0].mxu0 %v1119
        %v1158 = vpop.f32.mrb[0].mxu0
        %v1159 = vadd.f32 0.0, %v1158
        %v1160 = vpop.f32.mrb[0].mxu0
        %v1161 = vpop.f32.mrb[0].mxu0
        %v1162 = vpop.f32.mrb[0].mxu0
        %1163 = vdwg.mxu0
        %v1164 = vsel %vm355, %v1159, -inf
        %1165 = vmax.xlane.f32.xlu0 %v1164
        %v1166 = vpop.xlane.xlu0 %1165
        %v1167 = vsub.f32 %v1159, %v1166
        %v1168 = vmul.f32 %v1167, 1.442695
        %v1169 = vpow.pop %v1168
        %v1170 = vsel %vm355, %v1169, 0.0
        %1171 = vadd.xlane.f32.xlu0 %v1170
        %v1172 = vpop.xlane.xlu0 %1171
        %v1173 = vrcp.pop %v1172
        %v1174 = vmul.f32 %v1169, %v1173
        %v1175 = vpack.c.bf16 %v1174, %v1174
        %1176 = vrot.lane.b32.xlu0 %v304, 36
        %v1177 = vpop.permute.xlu0 %1176
        %v1179 = vsel %vm355, %v1175, 0
        %v1182 = vsel %vm373, %v1177, 0
        %1184 = vmatprep.subr.bf16.mxu0 0
        %1185 = vmatpush1.bf16.msra.mxu0 %v1182
        %1186 = vmatprep.subr.bf16.mxu0 0
        %1187 = vmatpush1.bf16.msra.mxu0 0
        %1188 = vmatprep.subr.bf16.mxu0 0
        %1189 = vmatpush1.bf16.msra.mxu0 0
        %1190 = vmatprep.subr.bf16.mxu0 0
        %1191 = vmatpush1.bf16.msra.mxu0 0
        %1192 = vmatprep.subr.bf16.mxu0 0
        %1193 = vmatpush1.bf16.msra.mxu0 0
        %1194 = vmatprep.subr.bf16.mxu0 0
        %1195 = vmatpush1.bf16.msra.mxu0 0
        %1196 = vmatprep.subr.bf16.mxu0 0
        %1197 = vmatpush1.bf16.msra.mxu0 0
        %1198 = vmatprep.subr.bf16.mxu0 0
        %1199 = vmatpush1.bf16.msra.mxu0 0
        %1200 = vmatprep.subr.bf16.mxu0 0
        %1201 = vmatpush1.bf16.msra.mxu0 0
        %1202 = vmatprep.subr.bf16.mxu0 0
        %1203 = vmatpush1.bf16.msra.mxu0 0
        %1204 = vmatprep.subr.bf16.mxu0 0
        %1205 = vmatpush1.bf16.msra.mxu0 0
        %1206 = vmatprep.subr.bf16.mxu0 0
        %1207 = vmatpush1.bf16.msra.mxu0 0
        %1208 = vmatprep.subr.bf16.mxu0 0
        %1209 = vmatpush1.bf16.msra.mxu0 0
        %1210 = vmatprep.subr.bf16.mxu0 0
        %1211 = vmatpush1.bf16.msra.mxu0 0
        %1212 = vmatprep.subr.bf16.mxu0 0
        %1213 = vmatpush1.bf16.msra.mxu0 0
        %1214 = vmatprep.subr.bf16.mxu0 0
        %1215 = vmatpush1.bf16.msra.mxu0 0
        %1216 = vmatprep.mubr.bf16.mxu0 0
        %1217 = vmatmul.mubr.bf16.gmra.mrb[0].mxu0 %v1179
        %v1218 = vpop.f32.mrb[0].mxu0
        %v1219 = vadd.f32 0.0, %v1218
        %v1220 = vpop.f32.mrb[0].mxu0
        %v1221 = vpop.f32.mrb[0].mxu0
        %v1222 = vpop.f32.mrb[0].mxu0
        %1223 = vdwg.mxu0
        %1225 = vrot.lane.b32.xlu0 %v1219, 28
        %v1226 = vpop.permute.xlu0 %1225
        %vm1228 = vcmask 261344
        %1229 = vst.msk [vmem:[#allocation2] sm:$0xff] %vm1228, %v1226
        %v1230 = vld [vmem:[#allocation2] sm:$0xff]
        %v1231 = vpack.c.bf16 %v1230, %v1230
        %v1232 = vld [vmem:[#allocation8] sm:$0xf]
        %v1233 = vld [vmem:[#allocation8 + $0x4] sm:$0xf]
        %v1234 = vld [vmem:[#allocation8 + $0x8] sm:$0xf]
        %v1235 = vld [vmem:[#allocation8 + $0xc] sm:$0xf]
        %v1236 = vld [vmem:[%s3] sm:$0x1]
        %v1238 = vlaneseq
        %v1239 = vshrl.u32 %v1238, 7
        %v1240 = vsub.s32 0, %v1239
        %v1241 = vrot.slane %v1236, %v1240
        %v1247 = vunpack.c.l.b16 %v1232
        %v1248 = vunpack.c.l.b16 %v1233
        %v1249 = vunpack.c.l.b16 %v1234
        %v1250 = vunpack.c.l.b16 %v1235
        %v1251 = vpack.c.b16 %v1248, %v1247
        %v1252 = vpack.c.b16 %v1250, %v1249
        %v1256 = vsel %vm260, %v1231, 0
        %1258 = vmatprep.subr.bf16.mxu0 0
        %1259 = vmatpush1.bf16.msra.mxu0 %v1251
        %1260 = vmatprep.subr.bf16.mxu0 0
        %1261 = vmatpush1.bf16.msra.mxu0 %v1252
        %1262 = vmatprep.subr.bf16.mxu0 0
        %1263 = vmatpush1.bf16.msra.mxu0 0
        %1264 = vmatprep.subr.bf16.mxu0 0
        %1265 = vmatpush1.bf16.msra.mxu0 0
        %1266 = vmatprep.subr.bf16.mxu0 0
        %1267 = vmatpush1.bf16.msra.mxu0 0
        %1268 = vmatprep.subr.bf16.mxu0 0
        %1269 = vmatpush1.bf16.msra.mxu0 0
        %1270 = vmatprep.subr.bf16.mxu0 0
        %1271 = vmatpush1.bf16.msra.mxu0 0
        %1272 = vmatprep.subr.bf16.mxu0 0
        %1273 = vmatpush1.bf16.msra.mxu0 0
        %1274 = vmatprep.subr.bf16.mxu0 0
        %1275 = vmatpush1.bf16.msra.mxu0 0
        %1276 = vmatprep.subr.bf16.mxu0 0
        %1277 = vmatpush1.bf16.msra.mxu0 0
        %1278 = vmatprep.subr.bf16.mxu0 0
        %1279 = vmatpush1.bf16.msra.mxu0 0
        %1280 = vmatprep.subr.bf16.mxu0 0
        %1281 = vmatpush1.bf16.msra.mxu0 0
        %1282 = vmatprep.subr.bf16.mxu0 0
        %1283 = vmatpush1.bf16.msra.mxu0 0
        %1284 = vmatprep.subr.bf16.mxu0 0
        %1285 = vmatpush1.bf16.msra.mxu0 0
        %1286 = vmatprep.subr.bf16.mxu0 0
        %1287 = vmatpush1.bf16.msra.mxu0 0
        %1288 = vmatprep.subr.bf16.mxu0 0
        %1289 = vmatpush1.bf16.msra.mxu0 0
        %1290 = vmatprep.mubr.bf16.mxu0 0
        %1291 = vmatmul.mubr.bf16.gmra.mrb[0].mxu0 %v1256
        %v1292 = vpop.f32.mrb[0].mxu0
        %v1293 = vadd.f32 %v1241, %v1292
        %v1294 = vpop.f32.mrb[0].mxu0
        %v1295 = vpop.f32.mrb[0].mxu0
        %v1296 = vpop.f32.mrb[0].mxu0
        %1297 = vdwg.mxu0
        %1298 = vst.msk [vmem:[%s241] sm:$0xff] %vm260, %v1293
        %s1299 = sand.u32 %s119, 1
        %s1300 = scalar_lea.sflag [#allocation5], %s1299
        %s1301 = sand.u32 %s119, 1
        %s1302 = smul.addr %s1301, 8
        %s1303 = scalar_lea.vmem [#allocation9], %s1302
        // Predicated region
        $region49: #{tpu_custom_call.1} parent=35 // pred_check
          %p1304 = pneg %p129
        $region50: #{tpu_custom_call.1} parent=35 // pred_check_branch
          %1306 = sbr.rel (%p1304) target = $region52
        $region51: #{tpu_custom_call.1} parent=35 // pred_region
          %s1308 = ssub.s32 128, 128
          %1309 = vsyncadd %s1300, %s1308
          %s1310 = smul.addr %s22, 128
          %s1311 = scalar_lea.hbm %s4, %s1310
          %s1313 = sshll.u32 %s1303, 4
          %s1314 = int_to_ptr.vmem [resolvable:$true] %s1313
          %1316 = dma.vmem_to_hbm [thread:$0]  %s1314, 128, %s1311, %s1300
        $region52: #{tpu_custom_call.1} parent=35 // pred_fallthru
          _
      $region36: #{tpu_custom_call.1} parent=5 // pred_fallthru
        _
      %p1317 = scmp.le.s32.totalorder 2, %s17
      // Predicated region
      $region53: #{tpu_custom_call.1} parent=5 // pred_check
        %p1318 = pneg %p1317
      $region54: #{tpu_custom_call.1} parent=5 // pred_check_branch
        %1320 = sbr.rel (%p1318) target = $region56
      $region55: #{tpu_custom_call.1} parent=5 // pred_region
        %s1321 = ssub.s32 %s17, 2
        // Predicated region
        $region57: #{tpu_custom_call.1} parent=55 // pred_check
          %p1322 = pneg %p135
        $region58: #{tpu_custom_call.1} parent=55 // pred_check_branch
          %1324 = sbr.rel (%p1322) target = $region60
        $region59: #{tpu_custom_call.1} parent=55 // pred_region
          %s1325 = sand.u32 %s120, 1
          %s1326 = scalar_lea.sflag [#allocation5], %s1325
          %s1327 = sand.u32 %s120, 1
          %s1328 = smul.addr %s1327, 8
          %s1329 = scalar_lea.vmem [#allocation9], %s1328
          %1330 = dma.done %s1326, 128
        $region60: #{tpu_custom_call.1} parent=55 // pred_fallthru
          _
      $region56: #{tpu_custom_call.1} parent=5 // pred_fallthru
        _
    $region6: #{tpu_custom_call.1} parent=1 // loop_footer
      %s21 = sadd.s32 1, %s17
    $region7: #{tpu_custom_call.1} parent=1 // loop_footer_branch
      %16 = sbr.rel target = $region3
    $region8: #{tpu_custom_call.1} parent=1 // loop_exit
      _
    %1331 = vsyncpa [#allocation4], 1
    %s1332 = scalar_lea.sflag [#allocation4], 1
    %1333 = vsyncpa %s1332, 1
    %1334 = vsyncpa [#allocation7], 1
    %1335 = vsyncpa [#allocation5], 1
    %s1336 = scalar_lea.sflag [#allocation5], 1
    %1337 = vsyncpa %s1336, 1

</llo_original>
